<compile_context>
chip_gen: v6e
topology: v6e:2x2x1
jax: 0.10.0
libtpu: 0.0.40
codegen_flags: <defaults>
</compile_context>

<pallas_src>
import math

import jax
import jax.numpy as jnp
from jax.experimental import pallas as pl
from jax.experimental.pallas import tpu as pltpu


def _fagcn_kernel(col_ref, h_row_ref, h_col_ref, degprod_ref,
                  w_row_ref, w_col_ref, gate_b_ref,
                  lin_wt_ref, lin_b_ref,
                  out_ref, acc_ref):
    i = pl.program_id(0)                       # N tile ("parallel")
    j = pl.program_id(1)                       # E tile (reduction, "arbitrary")
    n_tile = acc_ref.shape[0]
    e_tile = h_row_ref.shape[0]
    heads = w_row_ref.shape[1]

    @pl.when(j == 0)
    def _():
        acc_ref[...] = jnp.zeros_like(acc_ref)

    h_row = h_row_ref[...]                     # (E_t, D) f32, h[row]
    h_col = h_col_ref[...]                     # (E_t, D) f32, h[col]

    # All heads' gates with two MXU matmuls (no per-head cross-lane reductions).
    g = jnp.tanh(
        jnp.dot(h_row, w_row_ref[...], preferred_element_type=jnp.float32)
        + jnp.dot(h_col, w_col_ref[...], preferred_element_type=jnp.float32)
        + gate_b_ref[...])                     # (E_t, H)
    norm = g * degprod_ref[...]                # (E_t, H) * (E_t, 1)

    # Fused per-head messages, directly in concat layout: (E_t, H*D).
    msg = jnp.concatenate(
        [norm[:, hd:hd + 1] * h_row for hd in range(heads)], axis=1)
    msg = msg.astype(jnp.bfloat16)             # MXU operand; accumulation stays f32

    # Build the scatter-add one-hot tile on-chip from col indices (never in HBM).
    n_base = i * n_tile
    node_ids = n_base + jax.lax.broadcasted_iota(jnp.int32, (n_tile, e_tile), 0)
    st = jnp.where(node_ids == col_ref[...], 1.0, 0.0).astype(jnp.bfloat16)

    acc_ref[...] += jnp.dot(st, msg, preferred_element_type=jnp.float32)

    # Finalize: fused linear_cat + bias + ReLU; one narrow store per N tile.
    @pl.when(j == pl.num_programs(1) - 1)
    def _():
        res = jnp.dot(acc_ref[...], lin_wt_ref[...],
                      preferred_element_type=jnp.float32) + lin_b_ref[...]
        out_ref[...] = jnp.maximum(res, 0.0)


def multi_head_fa_layer(h, row, col, gate_w, gate_b, lin_cat_w, lin_cat_b,
                        *, n_tile=None, e_tile=128):
    """h: (N, D) f32; row/col: (E,) int32; gate_w: (heads, 2D); gate_b: (heads,);
    lin_cat_w: (out_dim, heads*D); lin_cat_b: (out_dim,)."""
    N, D = h.shape
    E = row.shape[0]
    heads = gate_w.shape[0]
    out_dim = lin_cat_w.shape[0]

    # ---- glue (plain JAX): degrees, edge gathers, parameter reshapes ----
    deg = jnp.zeros((N,), jnp.float32).at[row].add(1.0)
    deg = jnp.clip(deg, 1.0) ** -0.5
    degprod = (deg[row] * deg[col]).astype(jnp.float32)            # (E,)
    # TODO(synk): for very large E, gather h[row]/h[col] inside the kernel via
    # scalar-prefetched indices + manual DMA instead of materializing (E, D).
    h_row = h[row].astype(jnp.float32)
    h_col = h[col].astype(jnp.float32)
    col_i = col.astype(jnp.int32)

    # ---- pad E to a multiple of e_tile (padded edges scatter to node -1) ----
    e_pad = pl.cdiv(E, e_tile) * e_tile
    if e_pad != E:
        pe = e_pad - E
        h_row = jnp.pad(h_row, ((0, pe), (0, 0)))
        h_col = jnp.pad(h_col, ((0, pe), (0, 0)))
        degprod = jnp.pad(degprod, (0, pe))
        col_i = jnp.pad(col_i, (0, pe), constant_values=-1)
    degprod2 = degprod.reshape(e_pad, 1)
    col2d = col_i.reshape(1, e_pad)

    # ---- pad N to a multiple of n_tile (extra output rows dropped at the end) --
    if n_tile is None:
        n_tile = min(256, pl.cdiv(N, 8) * 8)
    n_pad = pl.cdiv(N, n_tile) * n_tile

    w_row = gate_w[:, :D].T.astype(jnp.float32)                    # (D, H)
    w_col = gate_w[:, D:].T.astype(jnp.float32)                    # (D, H)
    gate_b2 = gate_b.reshape(1, heads).astype(jnp.float32)
    lin_wt = lin_cat_w.T.astype(jnp.float32)                       # (H*D, out_dim)
    lin_b2 = lin_cat_b.reshape(1, out_dim).astype(jnp.float32)

    grid = (n_pad // n_tile, e_pad // e_tile)

    out = pl.pallas_call(
        _fagcn_kernel,
        out_shape=jax.ShapeDtypeStruct((n_pad, out_dim), jnp.float32),
        grid_spec=pltpu.PrefetchScalarGridSpec(
            num_scalar_prefetch=0,
            grid=grid,
            in_specs=[
                pl.BlockSpec((1, e_tile), lambda i, j: (0, j)),        # col
                pl.BlockSpec((e_tile, D), lambda i, j: (j, 0)),        # h[row]
                pl.BlockSpec((e_tile, D), lambda i, j: (j, 0)),        # h[col]
                pl.BlockSpec((e_tile, 1), lambda i, j: (j, 0)),        # deg prod
                pl.BlockSpec((D, heads), lambda i, j: (0, 0)),         # W_row
                pl.BlockSpec((D, heads), lambda i, j: (0, 0)),         # W_col
                pl.BlockSpec((1, heads), lambda i, j: (0, 0)),         # gate bias
                pl.BlockSpec((heads * D, out_dim), lambda i, j: (0, 0)),  # lin W^T
                pl.BlockSpec((1, out_dim), lambda i, j: (0, 0)),       # lin bias
            ],
            out_specs=pl.BlockSpec((n_tile, out_dim), lambda i, j: (i, 0)),
            scratch_shapes=[pltpu.VMEM((n_tile, heads * D), jnp.float32)],
        ),
        compiler_params=pltpu.CompilerParams(
            dimension_semantics=("parallel", "arbitrary"),
            vmem_limit_bytes=32 * 1024 * 1024,
        ),
    )(col2d, h_row, h_col, degprod2, w_row, w_col, gate_b2, lin_wt, lin_b2)

    return out[:N]


def reference(h, row, col, gate_w, gate_b, lin_cat_w, lin_cat_b):
    """Pure-JAX reference mirroring the PyTorch forward (eval mode)."""
    N, D = h.shape
    heads = gate_w.shape[0]
    deg = jnp.zeros((N,), jnp.float32).at[row].add(1.0)
    deg = jnp.clip(deg, 1.0) ** -0.5
    outs = []
    for hd in range(heads):
        h2 = jnp.concatenate([h[row], h[col]], axis=1)
        g = jnp.tanh(h2 @ gate_w[hd] + gate_b[hd])                 # (E,)
        norm = g * deg[row] * deg[col]
        msg = norm[:, None] * h[row]
        out = jnp.zeros((N, D), jnp.float32).at[col].add(msg)
        outs.append(out)
    cat = jnp.concatenate(outs, axis=1)
    return jax.nn.relu(cat @ lin_cat_w.T + lin_cat_b)


def _xavier_normal(key, shape, gain):
    fan_out, fan_in = shape
    std = gain * math.sqrt(2.0 / (fan_in + fan_out))
    return std * jax.random.normal(key, shape, dtype=jnp.float32)


if __name__ == "__main__":
    # Small shapes consistent with the module (big enough to exercise the grid).
    N, D, E, heads, out_dim = 64, 32, 256, 4, 32

    key = jax.random.PRNGKey(0)
    k_h, k_r, k_c, k_gw, k_gb, k_lw, k_lb = jax.random.split(key, 7)

    h = jax.random.normal(k_h, (N, D), dtype=jnp.float32)
    row = jax.random.randint(k_r, (E,), 0, N, dtype=jnp.int32)
    col = jax.random.randint(k_c, (E,), 0, N, dtype=jnp.int32)

    # Per-head gate Linear(2D, 1), xavier_normal_(gain=1.414); small bias.
    gate_w = jnp.stack([
        _xavier_normal(k, (1, 2 * D), gain=1.414).reshape(2 * D)
        for k in jax.random.split(k_gw, heads)
    ])                                                              # (heads, 2D)
    gate_b = 0.01 * jax.random.normal(k_gb, (heads,), dtype=jnp.float32)

    # linear_cat: Linear(heads*D, out_dim), xavier_normal_(gain=1.414).
    lin_cat_w = _xavier_normal(k_lw, (out_dim, heads * D), gain=1.414)
    lin_cat_b = 0.01 * jax.random.normal(k_lb, (out_dim,), dtype=jnp.float32)

    out = multi_head_fa_layer(h, row, col, gate_w, gate_b, lin_cat_w, lin_cat_b,
                              n_tile=32, e_tile=128)
    out = jax.block_until_ready(out)

    ref = reference(h, row, col, gate_w, gate_b, lin_cat_w, lin_cat_b)
    assert out.shape == (N, out_dim)
    # bf16 MXU operands for the scatter matmul (f32 accumulation) -> relaxed tol.
    assert jnp.allclose(out, ref, atol=3e-2, rtol=3e-2), \
        f"max abs err {jnp.max(jnp.abs(out - ref))}"

    print("KERNEL_OK")
</pallas_src>

<mosaic_0001>
module attributes {stable_mosaic.version = 11 : i64} {
  func.func @_fagcn_kernel(%arg0: i32, %arg1: i32, %arg2: memref<1x128xi32, #tpu.memory_space<vmem>>, %arg3: memref<128x32xf32, #tpu.memory_space<vmem>>, %arg4: memref<128x32xf32, #tpu.memory_space<vmem>>, %arg5: memref<128x1xf32, #tpu.memory_space<vmem>>, %arg6: memref<32x4xf32, #tpu.memory_space<vmem>>, %arg7: memref<32x4xf32, #tpu.memory_space<vmem>>, %arg8: memref<1x4xf32, #tpu.memory_space<vmem>>, %arg9: memref<128x32xf32, #tpu.memory_space<vmem>>, %arg10: memref<1x32xf32, #tpu.memory_space<vmem>>, %arg11: memref<32x32xf32, #tpu.memory_space<vmem>>, %arg12: memref<32x128xf32, #tpu.memory_space<vmem>>) attributes {dimension_semantics = [#tpu.dimension_semantics<parallel>, #tpu.dimension_semantics<arbitrary>], iteration_bounds = array<i64: 2, 2>, scalar_prefetch = 0 : i64, scratch_operands = 1 : i64, tpu.core_type = #tpu.core_type<tc>, window_params = [{transform_indices = @transform_0, window_bounds = array<i64: 1, 128>}, {transform_indices = @transform_1, window_bounds = array<i64: 128, 32>}, {transform_indices = @transform_2, window_bounds = array<i64: 128, 32>}, {transform_indices = @transform_3, window_bounds = array<i64: 128, 1>}, {pipeline_mode = #tpu.pipeline_mode<synchronous>, transform_indices = @transform_4, window_bounds = array<i64: 32, 4>}, {pipeline_mode = #tpu.pipeline_mode<synchronous>, transform_indices = @transform_5, window_bounds = array<i64: 32, 4>}, {pipeline_mode = #tpu.pipeline_mode<synchronous>, transform_indices = @transform_6, window_bounds = array<i64: 1, 4>}, {pipeline_mode = #tpu.pipeline_mode<synchronous>, transform_indices = @transform_7, window_bounds = array<i64: 128, 32>}, {pipeline_mode = #tpu.pipeline_mode<synchronous>, transform_indices = @transform_8, window_bounds = array<i64: 1, 32>}, {transform_indices = @transform_9, window_bounds = array<i64: 32, 32>}]} {
    %c0_i32 = arith.constant 0 : i32
    %0 = arith.cmpi eq, %arg1, %c0_i32 : i32
    %1 = arith.extui %0 : i1 to i32
    %c0_i32_0 = arith.constant 0 : i32
    %2 = arith.cmpi ne, %1, %c0_i32_0 : i32
    scf.if %2 {
      %cst_23 = arith.constant 0.000000e+00 : f32
      %49 = vector.broadcast %cst_23 : f32 to vector<32x128xf32>
      %c0_24 = arith.constant 0 : index
      %c0_25 = arith.constant 0 : index
      %50 = vector.load %arg12[%c0_24, %c0_25] : memref<32x128xf32, #tpu.memory_space<vmem>>, vector<32x128xf32>
      tpu.vector_store %arg12[%c0_24, %c0_25], %49 {strides = array<i32>} : memref<32x128xf32, #tpu.memory_space<vmem>>, vector<32x128xf32>,
    } else {
    }
    %c0 = arith.constant 0 : index
    %c0_1 = arith.constant 0 : index
    %3 = vector.load %arg3[%c0, %c0_1] : memref<128x32xf32, #tpu.memory_space<vmem>>, vector<128x32xf32>
    %c0_2 = arith.constant 0 : index
    %c0_3 = arith.constant 0 : index
    %4 = vector.load %arg4[%c0_2, %c0_3] : memref<128x32xf32, #tpu.memory_space<vmem>>, vector<128x32xf32>
    %c0_4 = arith.constant 0 : index
    %c0_5 = arith.constant 0 : index
    %5 = vector.load %arg6[%c0_4, %c0_5] : memref<32x4xf32, #tpu.memory_space<vmem>>, vector<32x4xf32>
    %cst = arith.constant dense<0.000000e+00> : vector<128x4xf32>
    %6 = tpu.matmul %3, %5, %cst {dimension_numbers = #tpu.dot_dimension_numbers<[1], [0], [0], [1], [0, 0, 1, 1], [], []>} : vector<128x32xf32>, vector<32x4xf32>, vector<128x4xf32> -> vector<128x4xf32>
    %c0_6 = arith.constant 0 : index
    %c0_7 = arith.constant 0 : index
    %7 = vector.load %arg7[%c0_6, %c0_7] : memref<32x4xf32, #tpu.memory_space<vmem>>, vector<32x4xf32>
    %cst_8 = arith.constant dense<0.000000e+00> : vector<128x4xf32>
    %8 = tpu.matmul %4, %7, %cst_8 {dimension_numbers = #tpu.dot_dimension_numbers<[1], [0], [0], [1], [0, 0, 1, 1], [], []>} : vector<128x32xf32>, vector<32x4xf32>, vector<128x4xf32> -> vector<128x4xf32>
    %9 = arith.addf %6, %8 : vector<128x4xf32>
    %c0_9 = arith.constant 0 : index
    %c0_10 = arith.constant 0 : index
    %10 = vector.load %arg8[%c0_9, %c0_10] : memref<1x4xf32, #tpu.memory_space<vmem>>, vector<1x4xf32>
    %11 = vector.broadcast %10 : vector<1x4xf32> to vector<128x4xf32>
    %12 = arith.addf %9, %11 : vector<128x4xf32>
    %13 = math.tanh %12 : vector<128x4xf32>
    %c0_11 = arith.constant 0 : index
    %c0_12 = arith.constant 0 : index
    %14 = vector.load %arg5[%c0_11, %c0_12] : memref<128x1xf32, #tpu.memory_space<vmem>>, vector<128x1xf32>
    %15 = vector.broadcast %14 : vector<128x1xf32> to vector<128x4xf32>
    %16 = arith.mulf %13, %15 : vector<128x4xf32>
    %17 = vector.extract_strided_slice %16 {offsets = [0, 0], sizes = [128, 1], strides = [1, 1]} : vector<128x4xf32> to vector<128x1xf32>
    %18 = vector.broadcast %17 : vector<128x1xf32> to vector<128x32xf32>
    %19 = arith.mulf %18, %3 : vector<128x32xf32>
    %20 = vector.extract_strided_slice %16 {offsets = [0, 1], sizes = [128, 1], strides = [1, 1]} : vector<128x4xf32> to vector<128x1xf32>
    %21 = vector.broadcast %20 : vector<128x1xf32> to vector<128x32xf32>
    %22 = arith.mulf %21, %3 : vector<128x32xf32>
    %23 = vector.extract_strided_slice %16 {offsets = [0, 2], sizes = [128, 1], strides = [1, 1]} : vector<128x4xf32> to vector<128x1xf32>
    %24 = vector.broadcast %23 : vector<128x1xf32> to vector<128x32xf32>
    %25 = arith.mulf %24, %3 : vector<128x32xf32>
    %26 = vector.extract_strided_slice %16 {offsets = [0, 3], sizes = [128, 1], strides = [1, 1]} : vector<128x4xf32> to vector<128x1xf32>
    %27 = vector.broadcast %26 : vector<128x1xf32> to vector<128x32xf32>
    %28 = arith.mulf %27, %3 : vector<128x32xf32>
    %29 = tpu.concatenate %19, %22, %25, %28 in 1 : vector<128x32xf32>, vector<128x32xf32>, vector<128x32xf32>, vector<128x32xf32> -> vector<128x128xf32>
    %30 = arith.truncf %29 : vector<128x128xf32> to vector<128x128xbf16>
    %c32_i32 = arith.constant 32 : i32
    %31 = arith.muli %arg0, %c32_i32 : i32
    %32 = tpu.iota {dimensions = array<i32: 0>} : vector<32x128xi32>
    %33 = vector.broadcast %31 : i32 to vector<32x128xi32>
    %34 = arith.addi %33, %32 : vector<32x128xi32>
    %c0_13 = arith.constant 0 : index
    %c0_14 = arith.constant 0 : index
    %35 = vector.load %arg2[%c0_13, %c0_14] : memref<1x128xi32, #tpu.memory_space<vmem>>, vector<1x128xi32>
    %36 = vector.broadcast %35 : vector<1x128xi32> to vector<32x128xi32>
    %37 = arith.cmpi eq, %34, %36 : vector<32x128xi32>
    %cst_15 = arith.constant 1.000000e+00 : f32
    %cst_16 = arith.constant 0.000000e+00 : f32
    %38 = vector.broadcast %cst_15 : f32 to vector<32x128xf32>
    %39 = vector.broadcast %cst_16 : f32 to vector<32x128xf32>
    %40 = arith.select %37, %38, %39 : vector<32x128xi1>, vector<32x128xf32>
    %41 = arith.truncf %40 : vector<32x128xf32> to vector<32x128xbf16>
    %c0_17 = arith.constant 0 : index
    %c0_18 = arith.constant 0 : index
    %42 = vector.load %arg12[%c0_17, %c0_18] : memref<32x128xf32, #tpu.memory_space<vmem>>, vector<32x128xf32>
    %cst_19 = arith.constant dense<0.000000e+00> : vector<32x128xf32>
    %43 = tpu.matmul %41, %30, %cst_19 {dimension_numbers = #tpu.dot_dimension_numbers<[1], [0], [0], [1], [0, 0, 1, 1], [], []>} : vector<32x128xbf16>, vector<128x128xbf16>, vector<32x128xf32> -> vector<32x128xf32>
    %44 = arith.addf %42, %43 : vector<32x128xf32>
    %c0_20 = arith.constant 0 : index
    %c0_21 = arith.constant 0 : index
    %45 = vector.load %arg12[%c0_20, %c0_21] : memref<32x128xf32, #tpu.memory_space<vmem>>, vector<32x128xf32>
    tpu.vector_store %arg12[%c0_20, %c0_21], %44 {strides = array<i32>} : memref<32x128xf32, #tpu.memory_space<vmem>>, vector<32x128xf32>,
    %c1_i32 = arith.constant 1 : i32
    %46 = arith.cmpi eq, %arg1, %c1_i32 : i32
    %47 = arith.extui %46 : i1 to i32
    %c0_i32_22 = arith.constant 0 : i32
    %48 = arith.cmpi ne, %47, %c0_i32_22 : i32
    scf.if %48 {
      %c0_23 = arith.constant 0 : index
      %c0_24 = arith.constant 0 : index
      %49 = vector.load %arg12[%c0_23, %c0_24] : memref<32x128xf32, #tpu.memory_space<vmem>>, vector<32x128xf32>
      %c0_25 = arith.constant 0 : index
      %c0_26 = arith.constant 0 : index
      %50 = vector.load %arg9[%c0_25, %c0_26] : memref<128x32xf32, #tpu.memory_space<vmem>>, vector<128x32xf32>
      %cst_27 = arith.constant dense<0.000000e+00> : vector<32x32xf32>
      %51 = tpu.matmul %49, %50, %cst_27 {dimension_numbers = #tpu.dot_dimension_numbers<[1], [0], [0], [1], [0, 0, 1, 1], [], []>} : vector<32x128xf32>, vector<128x32xf32>, vector<32x32xf32> -> vector<32x32xf32>
      %c0_28 = arith.constant 0 : index
      %c0_29 = arith.constant 0 : index
      %52 = vector.load %arg10[%c0_28, %c0_29] : memref<1x32xf32, #tpu.memory_space<vmem>>, vector<1x32xf32>
      %53 = vector.broadcast %52 : vector<1x32xf32> to vector<32x32xf32>
      %54 = arith.addf %51, %53 : vector<32x32xf32>
      %cst_30 = arith.constant 0.000000e+00 : f32
      %55 = vector.broadcast %cst_30 : f32 to vector<32x32xf32>
      %56 = arith.maximumf %54, %55 : vector<32x32xf32>
      %c0_31 = arith.constant 0 : index
      %c0_32 = arith.constant 0 : index
      %57 = vector.load %arg11[%c0_31, %c0_32] : memref<32x32xf32, #tpu.memory_space<vmem>>, vector<32x32xf32>
      tpu.vector_store %arg11[%c0_31, %c0_32], %56 {strides = array<i32>} : memref<32x32xf32, #tpu.memory_space<vmem>>, vector<32x32xf32>,
    } else {
    }
    return
  }
  func.func @transform_0(%arg0: i32, %arg1: i32) -> (i32, i32) {
    %c0_i32 = arith.constant 0 : i32
    %c0_i32_0 = arith.constant 0 : i32
    return %c0_i32, %arg1 : i32, i32
  }
  func.func @transform_1(%arg0: i32, %arg1: i32) -> (i32, i32) {
    %c0_i32 = arith.constant 0 : i32
    %c0_i32_0 = arith.constant 0 : i32
    return %arg1, %c0_i32 : i32, i32
  }
  func.func @transform_2(%arg0: i32, %arg1: i32) -> (i32, i32) {
    %c0_i32 = arith.constant 0 : i32
    %c0_i32_0 = arith.constant 0 : i32
    return %arg1, %c0_i32 : i32, i32
  }
  func.func @transform_3(%arg0: i32, %arg1: i32) -> (i32, i32) {
    %c0_i32 = arith.constant 0 : i32
    %c0_i32_0 = arith.constant 0 : i32
    return %arg1, %c0_i32 : i32, i32
  }
  func.func @transform_4(%arg0: i32, %arg1: i32) -> (i32, i32) {
    %c0_i32 = arith.constant 0 : i32
    %c0_i32_0 = arith.constant 0 : i32
    %c0_i32_1 = arith.constant 0 : i32
    return %c0_i32, %c0_i32_0 : i32, i32
  }
  func.func @transform_5(%arg0: i32, %arg1: i32) -> (i32, i32) {
    %c0_i32 = arith.constant 0 : i32
    %c0_i32_0 = arith.constant 0 : i32
    %c0_i32_1 = arith.constant 0 : i32
    return %c0_i32, %c0_i32_0 : i32, i32
  }
  func.func @transform_6(%arg0: i32, %arg1: i32) -> (i32, i32) {
    %c0_i32 = arith.constant 0 : i32
    %c0_i32_0 = arith.constant 0 : i32
    %c0_i32_1 = arith.constant 0 : i32
    return %c0_i32, %c0_i32_0 : i32, i32
  }
  func.func @transform_7(%arg0: i32, %arg1: i32) -> (i32, i32) {
    %c0_i32 = arith.constant 0 : i32
    %c0_i32_0 = arith.constant 0 : i32
    %c0_i32_1 = arith.constant 0 : i32
    return %c0_i32, %c0_i32_0 : i32, i32
  }
  func.func @transform_8(%arg0: i32, %arg1: i32) -> (i32, i32) {
    %c0_i32 = arith.constant 0 : i32
    %c0_i32_0 = arith.constant 0 : i32
    %c0_i32_1 = arith.constant 0 : i32
    return %c0_i32, %c0_i32_0 : i32, i32
  }
  func.func @transform_9(%arg0: i32, %arg1: i32) -> (i32, i32) {
    %c0_i32 = arith.constant 0 : i32
    %c0_i32_0 = arith.constant 0 : i32
    return %arg0, %c0_i32 : i32, i32
  }
}

</mosaic_0001>

<llo_original>
// kernel: tpu_custom_call.1
$region0: #{tpu_custom_call.1}
  #allocation0 [shape = 'u32[]', space=smem, size = 0x4, offset = 0x4, fixed_abs, tag = 'smem constant byte address 0x4 - core index']
  #allocation1 [shape = 'u32[144,128]{1,0:T(1,128)}', space=vmem, size = 0x12000, scoped, tag = 'internal scratch']
  #allocation2 [shape = 'f32[32,128]{1,0:T(8,128)}', space=vmem, size = 0x4000, scoped, tag = 'scratch operand']
  %s0 = inlined_call_operand.vmem [shape: s32[1,256], index: 0, kind: input, shape index: {}]
  %s1 = inlined_call_operand.vmem [shape: f32[256,32], index: 1, kind: input, shape index: {}]
  %s2 = inlined_call_operand.vmem [shape: f32[256,32], index: 2, kind: input, shape index: {}]
  %s3 = inlined_call_operand.vmem [shape: f32[256,1], index: 3, kind: input, shape index: {}]
  %s4 = inlined_call_operand.vmem [shape: f32[32,4], index: 4, kind: input, shape index: {}]
  %s5 = inlined_call_operand.vmem [shape: f32[32,4], index: 5, kind: input, shape index: {}]
  %s6 = inlined_call_operand.vmem [shape: f32[1,4], index: 6, kind: input, shape index: {}]
  %s7 = inlined_call_operand.vmem [shape: f32[128,32], index: 7, kind: input, shape index: {}]
  %s8 = inlined_call_operand.vmem [shape: f32[1,32], index: 8, kind: input, shape index: {}]
  %s9 = inlined_call_operand.vmem [shape: f32[64,32], index: 9, kind: output, shape index: {}]
  %s10 = sld [smem:[#allocation0]]
  $region77: #{tpu_custom_call.1} parent=0
    _
  %s12 = ssub.s32 1, %s10
  %s13 = scalar_select 0, %s12, %s10
  loop: start=0, step=1, limit=6
  $region2: #{tpu_custom_call.1} parent=0 // loop_pre_header
    _
  $region3: #{tpu_custom_call.1} parent=0 // loop_header
    %s15 = sphi 0, %s19
    %p16 = scmp.ge.s32.totalorder %s15, 6
    %s22 = sphi 0, %s34
    %s23 = sphi 0, %s30
    %s24 = sphi 0, %s22
    %s25 = sphi 0, %s23
    %s26 = sphi 0, %s24
    %s27 = sphi 0, %s25
    %s37 = sphi 0, %s39
    %s40 = sphi 0, %s37
    %s41 = sphi 0, %s40
    %s57 = sphi 0, %s41
    %s63 = sphi 0, %s65
    %s66 = sphi 0, %s63
    %s67 = sphi 0, %s66
    %s83 = sphi 0, %s67
    %s89 = sphi 0, %s91
    %s92 = sphi 0, %s89
    %s93 = sphi 0, %s92
    %s109 = sphi 0, %s93
    %s115 = sphi 0, %s117
    %s118 = sphi 0, %s115
    %s119 = sphi 0, %s118
    %s135 = sphi 0, %s119
    %s139 = sphi 0, %s139
    %s141 = sphi 0, %s139
    %s142 = sphi 0, %s141
    %s156 = sphi 0, %s142
    %s160 = sphi 0, %s160
    %s162 = sphi 0, %s160
    %s163 = sphi 0, %s162
    %s177 = sphi 0, %s163
    %s181 = sphi 0, %s181
    %s183 = sphi 0, %s181
    %s184 = sphi 0, %s183
    %s198 = sphi 0, %s184
    %s202 = sphi 0, %s202
    %s204 = sphi 0, %s202
    %s205 = sphi 0, %s204
    %s219 = sphi 0, %s205
    %s223 = sphi 0, %s223
    %s225 = sphi 0, %s223
    %s226 = sphi 0, %s225
    %s240 = sphi 0, %s226
    %s246 = sphi 0, %s248
    %s249 = sphi 0, %s246
    %s250 = sphi 0, %s249
    %s266 = sphi 0, %s250
  $region4: #{tpu_custom_call.1} parent=0 // loop_header_branch
    %18 = sbr.rel (%p16) target = $region8
  $region5: #{tpu_custom_call.1} parent=0 // loop_body
    %s20 = ssub.s32 %s15, 1
    %s21 = ssub.s32 %s15, 2
    %s28 = sadd.s32 1, %s23
    %p29 = scmp.ge.s32.totalorder %s28, 2
    %s30 = scalar_select %p29, 0, %s28
    %s31 = sadd.s32 1, %s22
    %s32 = scalar_select %p29, %s31, %s22
    %p33 = scmp.ge.s32.totalorder %s32, 2
    %s34 = scalar_select %p33, 0, %s32
    %s35 = ssub.s32 %s23, %s30
    %p36 = scmp.eq.s32.totalorder %s35, 0
    %s38 = sadd.s32 %s37, 1
    %s39 = scalar_select %p36, %s37, %s38
    %p42 = pneg %p36
    %p43 = scmp.eq.s32.totalorder %s15, 3
    %p44 = por %p42, %p43
    %p45 = scmp.ne.s32.totalorder %s37, %s40
    %p46 = scmp.eq.s32.totalorder %s15, 0
    %p47 = por %p45, %p46
    %p48 = scmp.ne.s32.totalorder %s37, %s40
    %p49 = scmp.eq.s32.totalorder %s20, 3
    %p50 = por %p48, %p49
    %p51 = scmp.ne.s32.totalorder %s40, %s41
    %p52 = scmp.eq.s32.totalorder %s20, 0
    %p53 = por %p51, %p52
    %p54 = scmp.ne.s32.totalorder %s40, %s41
    %p55 = scmp.eq.s32.totalorder %s21, 3
    %p56 = por %p54, %p55
    %p58 = scmp.ne.s32.totalorder %s41, %s57
    %p59 = scmp.eq.s32.totalorder %s21, 0
    %p60 = por %p58, %p59
    %s61 = ssub.s32 %s23, %s30
    %p62 = scmp.eq.s32.totalorder %s61, 0
    %s64 = sadd.s32 %s63, 1
    %s65 = scalar_select %p62, %s63, %s64
    %p68 = pneg %p62
    %p69 = scmp.eq.s32.totalorder %s15, 3
    %p70 = por %p68, %p69
    %p71 = scmp.ne.s32.totalorder %s63, %s66
    %p72 = scmp.eq.s32.totalorder %s15, 0
    %p73 = por %p71, %p72
    %p74 = scmp.ne.s32.totalorder %s63, %s66
    %p75 = scmp.eq.s32.totalorder %s20, 3
    %p76 = por %p74, %p75
    %p77 = scmp.ne.s32.totalorder %s66, %s67
    %p78 = scmp.eq.s32.totalorder %s20, 0
    %p79 = por %p77, %p78
    %p80 = scmp.ne.s32.totalorder %s66, %s67
    %p81 = scmp.eq.s32.totalorder %s21, 3
    %p82 = por %p80, %p81
    %p84 = scmp.ne.s32.totalorder %s67, %s83
    %p85 = scmp.eq.s32.totalorder %s21, 0
    %p86 = por %p84, %p85
    %s87 = ssub.s32 %s23, %s30
    %p88 = scmp.eq.s32.totalorder %s87, 0
    %s90 = sadd.s32 %s89, 1
    %s91 = scalar_select %p88, %s89, %s90
    %p94 = pneg %p88
    %p95 = scmp.eq.s32.totalorder %s15, 3
    %p96 = por %p94, %p95
    %p97 = scmp.ne.s32.totalorder %s89, %s92
    %p98 = scmp.eq.s32.totalorder %s15, 0
    %p99 = por %p97, %p98
    %p100 = scmp.ne.s32.totalorder %s89, %s92
    %p101 = scmp.eq.s32.totalorder %s20, 3
    %p102 = por %p100, %p101
    %p103 = scmp.ne.s32.totalorder %s92, %s93
    %p104 = scmp.eq.s32.totalorder %s20, 0
    %p105 = por %p103, %p104
    %p106 = scmp.ne.s32.totalorder %s92, %s93
    %p107 = scmp.eq.s32.totalorder %s21, 3
    %p108 = por %p106, %p107
    %p110 = scmp.ne.s32.totalorder %s93, %s109
    %p111 = scmp.eq.s32.totalorder %s21, 0
    %p112 = por %p110, %p111
    %s113 = ssub.s32 %s23, %s30
    %p114 = scmp.eq.s32.totalorder %s113, 0
    %s116 = sadd.s32 %s115, 1
    %s117 = scalar_select %p114, %s115, %s116
    %p120 = pneg %p114
    %p121 = scmp.eq.s32.totalorder %s15, 3
    %p122 = por %p120, %p121
    %p123 = scmp.ne.s32.totalorder %s115, %s118
    %p124 = scmp.eq.s32.totalorder %s15, 0
    %p125 = por %p123, %p124
    %p126 = scmp.ne.s32.totalorder %s115, %s118
    %p127 = scmp.eq.s32.totalorder %s20, 3
    %p128 = por %p126, %p127
    %p129 = scmp.ne.s32.totalorder %s118, %s119
    %p130 = scmp.eq.s32.totalorder %s20, 0
    %p131 = por %p129, %p130
    %p132 = scmp.ne.s32.totalorder %s118, %s119
    %p133 = scmp.eq.s32.totalorder %s21, 3
    %p134 = por %p132, %p133
    %p136 = scmp.ne.s32.totalorder %s119, %s135
    %p137 = scmp.eq.s32.totalorder %s21, 0
    %p138 = por %p136, %p137
    %s140 = sadd.s32 %s139, 1
    %p143 = scmp.eq.s32.totalorder %s15, 3
    %p144 = scmp.ne.s32.totalorder %s139, %s141
    %p145 = scmp.eq.s32.totalorder %s15, 0
    %p146 = por %p144, %p145
    %p147 = scmp.ne.s32.totalorder %s139, %s141
    %p148 = scmp.eq.s32.totalorder %s20, 3
    %p149 = por %p147, %p148
    %p150 = scmp.ne.s32.totalorder %s141, %s142
    %p151 = scmp.eq.s32.totalorder %s20, 0
    %p152 = por %p150, %p151
    %p153 = scmp.ne.s32.totalorder %s141, %s142
    %p154 = scmp.eq.s32.totalorder %s21, 3
    %p155 = por %p153, %p154
    %p157 = scmp.ne.s32.totalorder %s142, %s156
    %p158 = scmp.eq.s32.totalorder %s21, 0
    %p159 = por %p157, %p158
    %s161 = sadd.s32 %s160, 1
    %p164 = scmp.eq.s32.totalorder %s15, 3
    %p165 = scmp.ne.s32.totalorder %s160, %s162
    %p166 = scmp.eq.s32.totalorder %s15, 0
    %p167 = por %p165, %p166
    %p168 = scmp.ne.s32.totalorder %s160, %s162
    %p169 = scmp.eq.s32.totalorder %s20, 3
    %p170 = por %p168, %p169
    %p171 = scmp.ne.s32.totalorder %s162, %s163
    %p172 = scmp.eq.s32.totalorder %s20, 0
    %p173 = por %p171, %p172
    %p174 = scmp.ne.s32.totalorder %s162, %s163
    %p175 = scmp.eq.s32.totalorder %s21, 3
    %p176 = por %p174, %p175
    %p178 = scmp.ne.s32.totalorder %s163, %s177
    %p179 = scmp.eq.s32.totalorder %s21, 0
    %p180 = por %p178, %p179
    %s182 = sadd.s32 %s181, 1
    %p185 = scmp.eq.s32.totalorder %s15, 3
    %p186 = scmp.ne.s32.totalorder %s181, %s183
    %p187 = scmp.eq.s32.totalorder %s15, 0
    %p188 = por %p186, %p187
    %p189 = scmp.ne.s32.totalorder %s181, %s183
    %p190 = scmp.eq.s32.totalorder %s20, 3
    %p191 = por %p189, %p190
    %p192 = scmp.ne.s32.totalorder %s183, %s184
    %p193 = scmp.eq.s32.totalorder %s20, 0
    %p194 = por %p192, %p193
    %p195 = scmp.ne.s32.totalorder %s183, %s184
    %p196 = scmp.eq.s32.totalorder %s21, 3
    %p197 = por %p195, %p196
    %p199 = scmp.ne.s32.totalorder %s184, %s198
    %p200 = scmp.eq.s32.totalorder %s21, 0
    %p201 = por %p199, %p200
    %s203 = sadd.s32 %s202, 1
    %p206 = scmp.eq.s32.totalorder %s15, 3
    %p207 = scmp.ne.s32.totalorder %s202, %s204
    %p208 = scmp.eq.s32.totalorder %s15, 0
    %p209 = por %p207, %p208
    %p210 = scmp.ne.s32.totalorder %s202, %s204
    %p211 = scmp.eq.s32.totalorder %s20, 3
    %p212 = por %p210, %p211
    %p213 = scmp.ne.s32.totalorder %s204, %s205
    %p214 = scmp.eq.s32.totalorder %s20, 0
    %p215 = por %p213, %p214
    %p216 = scmp.ne.s32.totalorder %s204, %s205
    %p217 = scmp.eq.s32.totalorder %s21, 3
    %p218 = por %p216, %p217
    %p220 = scmp.ne.s32.totalorder %s205, %s219
    %p221 = scmp.eq.s32.totalorder %s21, 0
    %p222 = por %p220, %p221
    %s224 = sadd.s32 %s223, 1
    %p227 = scmp.eq.s32.totalorder %s15, 3
    %p228 = scmp.ne.s32.totalorder %s223, %s225
    %p229 = scmp.eq.s32.totalorder %s15, 0
    %p230 = por %p228, %p229
    %p231 = scmp.ne.s32.totalorder %s223, %s225
    %p232 = scmp.eq.s32.totalorder %s20, 3
    %p233 = por %p231, %p232
    %p234 = scmp.ne.s32.totalorder %s225, %s226
    %p235 = scmp.eq.s32.totalorder %s20, 0
    %p236 = por %p234, %p235
    %p237 = scmp.ne.s32.totalorder %s225, %s226
    %p238 = scmp.eq.s32.totalorder %s21, 3
    %p239 = por %p237, %p238
    %p241 = scmp.ne.s32.totalorder %s226, %s240
    %p242 = scmp.eq.s32.totalorder %s21, 0
    %p243 = por %p241, %p242
    %s244 = ssub.s32 %s22, %s34
    %p245 = scmp.eq.s32.totalorder %s244, 0
    %s247 = sadd.s32 %s246, 1
    %s248 = scalar_select %p245, %s246, %s247
    %p251 = pneg %p245
    %p252 = scmp.eq.s32.totalorder %s15, 3
    %p253 = por %p251, %p252
    %p254 = scmp.ne.s32.totalorder %s246, %s249
    %p255 = scmp.eq.s32.totalorder %s15, 0
    %p256 = por %p254, %p255
    %p257 = scmp.ne.s32.totalorder %s246, %s249
    %p258 = scmp.eq.s32.totalorder %s20, 3
    %p259 = por %p257, %p258
    %p260 = scmp.ne.s32.totalorder %s249, %s250
    %p261 = scmp.eq.s32.totalorder %s20, 0
    %p262 = por %p260, %p261
    %p263 = scmp.ne.s32.totalorder %s249, %s250
    %p264 = scmp.eq.s32.totalorder %s21, 3
    %p265 = por %p263, %p264
    %p267 = scmp.ne.s32.totalorder %s250, %s266
    %p268 = scmp.eq.s32.totalorder %s21, 0
    %p269 = por %p267, %p268
    %p270 = scmp.le.s32.totalorder 1, %s15
    %p271 = scmp.lt.s32.totalorder %s15, 5
    %p272 = pnand %p270, %p271
    %p273 = pneg %p272
    // Predicated region
    $region9: #{tpu_custom_call.1} parent=5 // pred_check
      _
    $region10: #{tpu_custom_call.1} parent=5 // pred_check_branch
      %275 = sbr.rel (%p272) target = $region12
    $region11: #{tpu_custom_call.1} parent=5 // pred_region
      %s276 = ssub.s32 %s15, 1
      // Predicated region
      $region13: #{tpu_custom_call.1} parent=11 // pred_check
        %p277 = pneg %p152
      $region14: #{tpu_custom_call.1} parent=11 // pred_check_branch
        %279 = sbr.rel (%p277) target = $region16
      $region15: #{tpu_custom_call.1} parent=11 // pred_region
        _
      $region16: #{tpu_custom_call.1} parent=11 // pred_fallthru
        _
      // Predicated region
      $region17: #{tpu_custom_call.1} parent=11 // pred_check
        %p280 = pneg %p173
      $region18: #{tpu_custom_call.1} parent=11 // pred_check_branch
        %282 = sbr.rel (%p280) target = $region20
      $region19: #{tpu_custom_call.1} parent=11 // pred_region
        _
      $region20: #{tpu_custom_call.1} parent=11 // pred_fallthru
        _
      // Predicated region
      $region21: #{tpu_custom_call.1} parent=11 // pred_check
        %p283 = pneg %p194
      $region22: #{tpu_custom_call.1} parent=11 // pred_check_branch
        %285 = sbr.rel (%p283) target = $region24
      $region23: #{tpu_custom_call.1} parent=11 // pred_region
        _
      $region24: #{tpu_custom_call.1} parent=11 // pred_fallthru
        _
      // Predicated region
      $region25: #{tpu_custom_call.1} parent=11 // pred_check
        %p286 = pneg %p215
      $region26: #{tpu_custom_call.1} parent=11 // pred_check_branch
        %288 = sbr.rel (%p286) target = $region28
      $region27: #{tpu_custom_call.1} parent=11 // pred_region
        _
      $region28: #{tpu_custom_call.1} parent=11 // pred_fallthru
        _
      // Predicated region
      $region29: #{tpu_custom_call.1} parent=11 // pred_check
        %p289 = pneg %p236
      $region30: #{tpu_custom_call.1} parent=11 // pred_check_branch
        %291 = sbr.rel (%p289) target = $region32
      $region31: #{tpu_custom_call.1} parent=11 // pred_region
        _
      $region32: #{tpu_custom_call.1} parent=11 // pred_fallthru
        _
    $region12: #{tpu_custom_call.1} parent=5 // pred_fallthru
      _
    %p292 = scmp.lt.s32.totalorder %s15, 4
    // Predicated region
    $region33: #{tpu_custom_call.1} parent=5 // pred_check
      %p293 = pneg %p292
    $region34: #{tpu_custom_call.1} parent=5 // pred_check_branch
      %295 = sbr.rel (%p293) target = $region36
    $region35: #{tpu_custom_call.1} parent=5 // pred_region
      // Predicated region
      $region37: #{tpu_custom_call.1} parent=35 // pred_check
        %p296 = pneg %p47
      $region38: #{tpu_custom_call.1} parent=35 // pred_check_branch
        %298 = sbr.rel (%p296) target = $region40
      $region39: #{tpu_custom_call.1} parent=35 // pred_region
        %p299 = scmp.lt.s32.totalorder %s23, 1
        %s300 = scalar_select %p299, %s23, 1
        %s301 = scalar_lea.vmem %s0, %s300
      $region40: #{tpu_custom_call.1} parent=35 // pred_fallthru
        _
      // Predicated region
      $region41: #{tpu_custom_call.1} parent=35 // pred_check
        %p302 = pneg %p73
      $region42: #{tpu_custom_call.1} parent=35 // pred_check_branch
        %304 = sbr.rel (%p302) target = $region44
      $region43: #{tpu_custom_call.1} parent=35 // pred_region
        %s305 = smul.u32 16, %s23
        %p306 = scmp.lt.s32.totalorder %s305, 31
        %s307 = scalar_select %p306, %s305, 31
        %s308 = smul.addr %s307, 8
        %s309 = scalar_lea.vmem %s1, %s308
        %s310 = smul.u32 16, %s23
      $region44: #{tpu_custom_call.1} parent=35 // pred_fallthru
        _
      // Predicated region
      $region45: #{tpu_custom_call.1} parent=35 // pred_check
        %p311 = pneg %p99
      $region46: #{tpu_custom_call.1} parent=35 // pred_check_branch
        %313 = sbr.rel (%p311) target = $region48
      $region47: #{tpu_custom_call.1} parent=35 // pred_region
        %s314 = smul.u32 16, %s23
        %p315 = scmp.lt.s32.totalorder %s314, 31
        %s316 = scalar_select %p315, %s314, 31
        %s317 = smul.addr %s316, 8
        %s318 = scalar_lea.vmem %s2, %s317
        %s319 = smul.u32 16, %s23
      $region48: #{tpu_custom_call.1} parent=35 // pred_fallthru
        _
      // Predicated region
      $region49: #{tpu_custom_call.1} parent=35 // pred_check
        %p320 = pneg %p125
      $region50: #{tpu_custom_call.1} parent=35 // pred_check_branch
        %322 = sbr.rel (%p320) target = $region52
      $region51: #{tpu_custom_call.1} parent=35 // pred_region
        %s323 = smul.u32 16, %s23
        %p324 = scmp.lt.s32.totalorder %s323, 31
        %s325 = scalar_select %p324, %s323, 31
        %s326 = smul.addr %s325, 8
        %s327 = scalar_lea.vmem %s3, %s326
        %s328 = smul.u32 16, %s23
      $region52: #{tpu_custom_call.1} parent=35 // pred_fallthru
        _
    $region36: #{tpu_custom_call.1} parent=5 // pred_fallthru
      _
    %p329 = scmp.le.s32.totalorder 1, %s15
    %p330 = scmp.lt.s32.totalorder %s15, 5
    %p331 = pnand %p329, %p330
    %p332 = pneg %p331
    // Predicated region
    $region53: #{tpu_custom_call.1} parent=5 // pred_check
      _
    $region54: #{tpu_custom_call.1} parent=5 // pred_check_branch
      %334 = sbr.rel (%p331) target = $region56
    $region55: #{tpu_custom_call.1} parent=5 // pred_region
      %s335 = ssub.s32 %s15, 1
      %p336 = scmp.lt.s32.totalorder %s25, 1
      %s337 = scalar_select %p336, %s25, 1
      %s338 = scalar_lea.vmem %s0, %s337
      %p339 = pneg %p53
      %p340 = pneg %p50
      %s341 = smul.u32 16, %s25
      %p342 = scmp.lt.s32.totalorder %s341, 31
      %s343 = scalar_select %p342, %s341, 31
      %s344 = smul.addr %s343, 8
      %s345 = scalar_lea.vmem %s1, %s344
      %p346 = pneg %p79
      %p347 = pneg %p76
      %s348 = smul.u32 16, %s25
      %p349 = scmp.lt.s32.totalorder %s348, 31
      %s350 = scalar_select %p349, %s348, 31
      %s351 = smul.addr %s350, 8
      %s352 = scalar_lea.vmem %s2, %s351
      %p353 = pneg %p105
      %p354 = pneg %p102
      %s355 = smul.u32 16, %s25
      %p356 = scmp.lt.s32.totalorder %s355, 31
      %s357 = scalar_select %p356, %s355, 31
      %s358 = smul.addr %s357, 8
      %s359 = scalar_lea.vmem %s3, %s358
      %p360 = pneg %p131
      %p361 = pneg %p128
      %p362 = pneg %p152
      %p363 = pneg %p149
      %p364 = pneg %p173
      %p365 = pneg %p170
      %p366 = pneg %p194
      %p367 = pneg %p191
      %p368 = pneg %p215
      %p369 = pneg %p212
      %p370 = pneg %p236
      %p371 = pneg %p233
      %p372 = pneg %p262
      %p373 = pneg %p259
      %s374 = smul.u32 4, %s24
      %p375 = scmp.lt.s32.totalorder %s374, 7
      %s376 = scalar_select %p375, %s374, 7
      %s377 = smul.addr %s376, 8
      %s378 = scalar_lea.vmem %s9, %s377
      %p379 = scmp.lt.s32.totalorder %s25, 1
      %s380 = scalar_select %p379, %s25, 1
      %s381 = scalar_lea.vmem %s0, %s380
      %s382 = smul.u32 16, %s25
      %p383 = scmp.lt.s32.totalorder %s382, 31
      %s384 = scalar_select %p383, %s382, 31
      %s385 = smul.addr %s384, 8
      %s386 = scalar_lea.vmem %s1, %s385
      %s387 = smul.u32 16, %s25
      %s388 = smul.u32 16, %s25
      %p389 = scmp.lt.s32.totalorder %s388, 31
      %s390 = scalar_select %p389, %s388, 31
      %s391 = smul.addr %s390, 8
      %s392 = scalar_lea.vmem %s2, %s391
      %s393 = smul.u32 16, %s25
      %s394 = smul.u32 16, %s25
      %p395 = scmp.lt.s32.totalorder %s394, 31
      %s396 = scalar_select %p395, %s394, 31
      %s397 = smul.addr %s396, 8
      %s398 = scalar_lea.vmem %s3, %s397
      %s399 = smul.u32 16, %s25
      %s400 = smul.u32 4, %s24
      %p401 = scmp.lt.s32.totalorder %s400, 7
      %s402 = scalar_select %p401, %s400, 7
      %s403 = smul.addr %s402, 8
      %s404 = scalar_lea.vmem %s9, %s403
      %s405 = smul.u32 4, %s24
      %p407 = scmp.eq.s32.totalorder %s25, 0
      // Predicated region
      $region57: #{tpu_custom_call.1} parent=55 // pred_check
        %p408 = pneg %p407
      $region58: #{tpu_custom_call.1} parent=55 // pred_check_branch
        %410 = sbr.rel (%p408) target = $region60
      $region59: #{tpu_custom_call.1} parent=55 // pred_region
        %411 = vst [vmem:[#allocation2] sm:$0xff] 0.0
        %412 = vst [vmem:[#allocation2 + $0x8] sm:$0xff] 0.0
        %413 = vst [vmem:[#allocation2 + $0x10] sm:$0xff] 0.0
        %414 = vst [vmem:[#allocation2 + $0x18] sm:$0xff] 0.0
      $region60: #{tpu_custom_call.1} parent=55 // pred_fallthru
        _
      %v415 = vld [vmem:[%s386] sm:$0xff]
      %v416 = vld [vmem:[%s386 + $0x8] sm:$0xff]
      %v417 = vld [vmem:[%s386 + $0x10] sm:$0xff]
      %v418 = vld [vmem:[%s386 + $0x18] sm:$0xff]
      %v419 = vld [vmem:[%s386 + $0x20] sm:$0xff]
      %v420 = vld [vmem:[%s386 + $0x28] sm:$0xff]
      %v421 = vld [vmem:[%s386 + $0x30] sm:$0xff]
      %v422 = vld [vmem:[%s386 + $0x38] sm:$0xff]
      %v423 = vld [vmem:[%s386 + $0x40] sm:$0xff]
      %v424 = vld [vmem:[%s386 + $0x48] sm:$0xff]
      %v425 = vld [vmem:[%s386 + $0x50] sm:$0xff]
      %v426 = vld [vmem:[%s386 + $0x58] sm:$0xff]
      %v427 = vld [vmem:[%s386 + $0x60] sm:$0xff]
      %v428 = vld [vmem:[%s386 + $0x68] sm:$0xff]
      %v429 = vld [vmem:[%s386 + $0x70] sm:$0xff]
      %v430 = vld [vmem:[%s386 + $0x78] sm:$0xff]
      %v431 = vld [vmem:[%s392] sm:$0xff]
      %v432 = vld [vmem:[%s392 + $0x8] sm:$0xff]
      %v433 = vld [vmem:[%s392 + $0x10] sm:$0xff]
      %v434 = vld [vmem:[%s392 + $0x18] sm:$0xff]
      %v435 = vld [vmem:[%s392 + $0x20] sm:$0xff]
      %v436 = vld [vmem:[%s392 + $0x28] sm:$0xff]
      %v437 = vld [vmem:[%s392 + $0x30] sm:$0xff]
      %v438 = vld [vmem:[%s392 + $0x38] sm:$0xff]
      %v439 = vld [vmem:[%s392 + $0x40] sm:$0xff]
      %v440 = vld [vmem:[%s392 + $0x48] sm:$0xff]
      %v441 = vld [vmem:[%s392 + $0x50] sm:$0xff]
      %v442 = vld [vmem:[%s392 + $0x58] sm:$0xff]
      %v443 = vld [vmem:[%s392 + $0x60] sm:$0xff]
      %v444 = vld [vmem:[%s392 + $0x68] sm:$0xff]
      %v445 = vld [vmem:[%s392 + $0x70] sm:$0xff]
      %v446 = vld [vmem:[%s392 + $0x78] sm:$0xff]
      %v447 = vld [vmem:[%s4] sm:$0xff]
      %v448 = vld [vmem:[%s4 + $0x8] sm:$0xff]
      %v449 = vld [vmem:[%s4 + $0x10] sm:$0xff]
      %v450 = vld [vmem:[%s4 + $0x18] sm:$0xff]
      %v451 = vld [vmem:[%s5] sm:$0xff]
      %v452 = vld [vmem:[%s5 + $0x8] sm:$0xff]
      %v453 = vld [vmem:[%s5 + $0x10] sm:$0xff]
      %v454 = vld [vmem:[%s5 + $0x18] sm:$0xff]
      %vm455 = vcmask 261120
      %v457 = vsel %vm455, %v431, 0
      %v460 = vsel %vm455, %v432, 0
      %v463 = vsel %vm455, %v433, 0
      %v466 = vsel %vm455, %v434, 0
      %v469 = vsel %vm455, %v435, 0
      %v472 = vsel %vm455, %v436, 0
      %v475 = vsel %vm455, %v437, 0
      %v478 = vsel %vm455, %v438, 0
      %v481 = vsel %vm455, %v439, 0
      %v484 = vsel %vm455, %v440, 0
      %v487 = vsel %vm455, %v441, 0
      %v490 = vsel %vm455, %v442, 0
      %v493 = vsel %vm455, %v443, 0
      %v496 = vsel %vm455, %v444, 0
      %v499 = vsel %vm455, %v445, 0
      %v502 = vsel %vm455, %v446, 0
      %504 = vmatprep.subr.mxu0 0.0
      %505 = vmatpush1.msra.mxu0 0.0
      %506 = vmatprep.subr.mxu0 0.0
      %507 = vmatpush1.msra.mxu0 0.0
      %508 = vmatprep.subr.mxu0 0.0
      %509 = vmatpush1.msra.mxu0 0.0
      %510 = vmatprep.subr.mxu0 0.0
      %511 = vmatpush1.msra.mxu0 0.0
      %512 = vmatprep.subr.mxu0 0.0
      %513 = vmatpush1.msra.mxu0 0.0
      %514 = vmatprep.subr.mxu0 0.0
      %515 = vmatpush1.msra.mxu0 0.0
      %516 = vmatprep.subr.mxu0 0.0
      %517 = vmatpush1.msra.mxu0 0.0
      %518 = vmatprep.subr.mxu0 0.0
      %519 = vmatpush1.msra.mxu0 0.0
      %520 = vmatprep.subr.mxu0 0.0
      %521 = vmatpush1.msra.mxu0 0.0
      %522 = vmatprep.subr.mxu0 0.0
      %523 = vmatpush1.msra.mxu0 0.0
      %524 = vmatprep.subr.mxu0 0.0
      %525 = vmatpush1.msra.mxu0 0.0
      %526 = vmatprep.subr.mxu0 0.0
      %527 = vmatpush1.msra.mxu0 0.0
      %528 = vmatprep.subr.mxu0 0.0
      %529 = vmatpush1.msra.mxu0 %v454
      %530 = vmatprep.subr.mxu0 0.0
      %531 = vmatpush1.msra.mxu0 %v453
      %532 = vmatprep.subr.mxu0 0.0
      %533 = vmatpush1.msra.mxu0 %v452
      %534 = vmatprep.subr.mxu0 0.0
      %535 = vmatpush1.msra.mxu0 %v451
      %536 = vmatprep.subr.mxu0 0.0
      %537 = vmatpush2.msra.mxu0 0.0
      %538 = vmatprep.subr.mxu0 0.0
      %539 = vmatpush2.msra.mxu0 0.0
      %540 = vmatprep.subr.mxu0 0.0
      %541 = vmatpush2.msra.mxu0 0.0
      %542 = vmatprep.subr.mxu0 0.0
      %543 = vmatpush2.msra.mxu0 0.0
      %544 = vmatprep.subr.mxu0 0.0
      %545 = vmatpush2.msra.mxu0 0.0
      %546 = vmatprep.subr.mxu0 0.0
      %547 = vmatpush2.msra.mxu0 0.0
      %548 = vmatprep.subr.mxu0 0.0
      %549 = vmatpush2.msra.mxu0 0.0
      %550 = vmatprep.subr.mxu0 0.0
      %551 = vmatpush2.msra.mxu0 0.0
      %552 = vmatprep.subr.mxu0 0.0
      %553 = vmatpush2.msra.mxu0 0.0
      %554 = vmatprep.subr.mxu0 0.0
      %555 = vmatpush2.msra.mxu0 0.0
      %556 = vmatprep.subr.mxu0 0.0
      %557 = vmatpush2.msra.mxu0 0.0
      %558 = vmatprep.subr.mxu0 0.0
      %559 = vmatpush2.msra.mxu0 0.0
      %560 = vmatprep.subr.mxu0 0.0
      %561 = vmatpush2.msra.mxu0 0.0
      %562 = vmatprep.subr.mxu0 0.0
      %563 = vmatpush2.msra.mxu0 0.0
      %564 = vmatprep.subr.mxu0 0.0
      %565 = vmatpush2.msra.mxu0 0.0
      %566 = vmatprep.subr.mxu0 0.0
      %567 = vmatpush2.msra.mxu0 0.0
      %568 = vmatprep.mubr.f32.mxu0 0.0
      %569 = vmatmul.mubr.f32.gmra.mxu0 %v457
      %v570 = vpop.f32.mrf.mxu0
      %v571 = vadd.f32 0.0, %v570
      %v572 = vpop.f32.mrf.mxu0
      %573 = vmatprep.mubr.f32.mxu0 0.0
      %574 = vmatmul.mubr.f32.gmra.mxu0 %v460
      %v575 = vpop.f32.mrf.mxu0
      %v576 = vadd.f32 0.0, %v575
      %v577 = vpop.f32.mrf.mxu0
      %578 = vmatprep.mubr.f32.mxu0 0.0
      %579 = vmatmul.mubr.f32.gmra.mxu0 %v463
      %v580 = vpop.f32.mrf.mxu0
      %v581 = vadd.f32 0.0, %v580
      %v582 = vpop.f32.mrf.mxu0
      %583 = vmatprep.mubr.f32.mxu0 0.0
      %584 = vmatmul.mubr.f32.gmra.mxu0 %v466
      %v585 = vpop.f32.mrf.mxu0
      %v586 = vadd.f32 0.0, %v585
      %v587 = vpop.f32.mrf.mxu0
      %588 = vmatprep.mubr.f32.mxu0 0.0
      %589 = vmatmul.mubr.f32.gmra.mxu0 %v469
      %v590 = vpop.f32.mrf.mxu0
      %v591 = vadd.f32 0.0, %v590
      %v592 = vpop.f32.mrf.mxu0
      %593 = vmatprep.mubr.f32.mxu0 0.0
      %594 = vmatmul.mubr.f32.gmra.mxu0 %v472
      %v595 = vpop.f32.mrf.mxu0
      %v596 = vadd.f32 0.0, %v595
      %v597 = vpop.f32.mrf.mxu0
      %598 = vmatprep.mubr.f32.mxu0 0.0
      %599 = vmatmul.mubr.f32.gmra.mxu0 %v475
      %v600 = vpop.f32.mrf.mxu0
      %v601 = vadd.f32 0.0, %v600
      %v602 = vpop.f32.mrf.mxu0
      %603 = vmatprep.mubr.f32.mxu0 0.0
      %604 = vmatmul.mubr.f32.gmra.mxu0 %v478
      %v605 = vpop.f32.mrf.mxu0
      %v606 = vadd.f32 0.0, %v605
      %v607 = vpop.f32.mrf.mxu0
      %608 = vmatprep.mubr.f32.mxu0 0.0
      %609 = vmatmul.mubr.f32.gmra.mxu0 %v481
      %v610 = vpop.f32.mrf.mxu0
      %v611 = vadd.f32 0.0, %v610
      %v612 = vpop.f32.mrf.mxu0
      %613 = vmatprep.mubr.f32.mxu0 0.0
      %614 = vmatmul.mubr.f32.gmra.mxu0 %v484
      %v615 = vpop.f32.mrf.mxu0
      %v616 = vadd.f32 0.0, %v615
      %v617 = vpop.f32.mrf.mxu0
      %618 = vmatprep.mubr.f32.mxu0 0.0
      %619 = vmatmul.mubr.f32.gmra.mxu0 %v487
      %v620 = vpop.f32.mrf.mxu0
      %v621 = vadd.f32 0.0, %v620
      %v622 = vpop.f32.mrf.mxu0
      %623 = vmatprep.mubr.f32.mxu0 0.0
      %624 = vmatmul.mubr.f32.gmra.mxu0 %v490
      %v625 = vpop.f32.mrf.mxu0
      %v626 = vadd.f32 0.0, %v625
      %v627 = vpop.f32.mrf.mxu0
      %628 = vmatprep.mubr.f32.mxu0 0.0
      %629 = vmatmul.mubr.f32.gmra.mxu0 %v493
      %v630 = vpop.f32.mrf.mxu0
      %v631 = vadd.f32 0.0, %v630
      %v632 = vpop.f32.mrf.mxu0
      %633 = vmatprep.mubr.f32.mxu0 0.0
      %634 = vmatmul.mubr.f32.gmra.mxu0 %v496
      %v635 = vpop.f32.mrf.mxu0
      %v636 = vadd.f32 0.0, %v635
      %v637 = vpop.f32.mrf.mxu0
      %638 = vmatprep.mubr.f32.mxu0 0.0
      %639 = vmatmul.mubr.f32.gmra.mxu0 %v499
      %v640 = vpop.f32.mrf.mxu0
      %v641 = vadd.f32 0.0, %v640
      %v642 = vpop.f32.mrf.mxu0
      %643 = vmatprep.mubr.f32.mxu0 0.0
      %644 = vmatmul.mubr.f32.gmra.mxu0 %v502
      %v645 = vpop.f32.mrf.mxu0
      %v646 = vadd.f32 0.0, %v645
      %v647 = vpop.f32.mrf.mxu0
      %648 = vdwg.mxu0
      %v650 = vsel %vm455, %v415, 0
      %v653 = vsel %vm455, %v416, 0
      %v656 = vsel %vm455, %v417, 0
      %v659 = vsel %vm455, %v418, 0
      %v662 = vsel %vm455, %v419, 0
      %v665 = vsel %vm455, %v420, 0
      %v668 = vsel %vm455, %v421, 0
      %v671 = vsel %vm455, %v422, 0
      %v674 = vsel %vm455, %v423, 0
      %v677 = vsel %vm455, %v424, 0
      %v680 = vsel %vm455, %v425, 0
      %v683 = vsel %vm455, %v426, 0
      %v686 = vsel %vm455, %v427, 0
      %v689 = vsel %vm455, %v428, 0
      %v692 = vsel %vm455, %v429, 0
      %v695 = vsel %vm455, %v430, 0
      %697 = vmatprep.subr.mxu0 0.0
      %698 = vmatpush1.msra.mxu0 0.0
      %699 = vmatprep.subr.mxu0 0.0
      %700 = vmatpush1.msra.mxu0 0.0
      %701 = vmatprep.subr.mxu0 0.0
      %702 = vmatpush1.msra.mxu0 0.0
      %703 = vmatprep.subr.mxu0 0.0
      %704 = vmatpush1.msra.mxu0 0.0
      %705 = vmatprep.subr.mxu0 0.0
      %706 = vmatpush1.msra.mxu0 0.0
      %707 = vmatprep.subr.mxu0 0.0
      %708 = vmatpush1.msra.mxu0 0.0
      %709 = vmatprep.subr.mxu0 0.0
      %710 = vmatpush1.msra.mxu0 0.0
      %711 = vmatprep.subr.mxu0 0.0
      %712 = vmatpush1.msra.mxu0 0.0
      %713 = vmatprep.subr.mxu0 0.0
      %714 = vmatpush1.msra.mxu0 0.0
      %715 = vmatprep.subr.mxu0 0.0
      %716 = vmatpush1.msra.mxu0 0.0
      %717 = vmatprep.subr.mxu0 0.0
      %718 = vmatpush1.msra.mxu0 0.0
      %719 = vmatprep.subr.mxu0 0.0
      %720 = vmatpush1.msra.mxu0 0.0
      %721 = vmatprep.subr.mxu0 0.0
      %722 = vmatpush1.msra.mxu0 %v450
      %723 = vmatprep.subr.mxu0 0.0
      %724 = vmatpush1.msra.mxu0 %v449
      %725 = vmatprep.subr.mxu0 0.0
      %726 = vmatpush1.msra.mxu0 %v448
      %727 = vmatprep.subr.mxu0 0.0
      %728 = vmatpush1.msra.mxu0 %v447
      %729 = vmatprep.subr.mxu0 0.0
      %730 = vmatpush2.msra.mxu0 0.0
      %731 = vmatprep.subr.mxu0 0.0
      %732 = vmatpush2.msra.mxu0 0.0
      %733 = vmatprep.subr.mxu0 0.0
      %734 = vmatpush2.msra.mxu0 0.0
      %735 = vmatprep.subr.mxu0 0.0
      %736 = vmatpush2.msra.mxu0 0.0
      %737 = vmatprep.subr.mxu0 0.0
      %738 = vmatpush2.msra.mxu0 0.0
      %739 = vmatprep.subr.mxu0 0.0
      %740 = vmatpush2.msra.mxu0 0.0
      %741 = vmatprep.subr.mxu0 0.0
      %742 = vmatpush2.msra.mxu0 0.0
      %743 = vmatprep.subr.mxu0 0.0
      %744 = vmatpush2.msra.mxu0 0.0
      %745 = vmatprep.subr.mxu0 0.0
      %746 = vmatpush2.msra.mxu0 0.0
      %747 = vmatprep.subr.mxu0 0.0
      %748 = vmatpush2.msra.mxu0 0.0
      %749 = vmatprep.subr.mxu0 0.0
      %750 = vmatpush2.msra.mxu0 0.0
      %751 = vmatprep.subr.mxu0 0.0
      %752 = vmatpush2.msra.mxu0 0.0
      %753 = vmatprep.subr.mxu0 0.0
      %754 = vmatpush2.msra.mxu0 0.0
      %755 = vmatprep.subr.mxu0 0.0
      %756 = vmatpush2.msra.mxu0 0.0
      %757 = vmatprep.subr.mxu0 0.0
      %758 = vmatpush2.msra.mxu0 0.0
      %759 = vmatprep.subr.mxu0 0.0
      %760 = vmatpush2.msra.mxu0 0.0
      %761 = vmatprep.mubr.f32.mxu0 0.0
      %762 = vmatmul.mubr.f32.gmra.mxu0 %v650
      %v763 = vpop.f32.mrf.mxu0
      %v764 = vadd.f32 %v571, %v763
      %v765 = vpop.f32.mrf.mxu0
      %766 = vmatprep.mubr.f32.mxu0 0.0
      %767 = vmatmul.mubr.f32.gmra.mxu0 %v653
      %v768 = vpop.f32.mrf.mxu0
      %v769 = vadd.f32 %v576, %v768
      %v770 = vpop.f32.mrf.mxu0
      %771 = vmatprep.mubr.f32.mxu0 0.0
      %772 = vmatmul.mubr.f32.gmra.mxu0 %v656
      %v773 = vpop.f32.mrf.mxu0
      %v774 = vadd.f32 %v581, %v773
      %v775 = vpop.f32.mrf.mxu0
      %776 = vmatprep.mubr.f32.mxu0 0.0
      %777 = vmatmul.mubr.f32.gmra.mxu0 %v659
      %v778 = vpop.f32.mrf.mxu0
      %v779 = vadd.f32 %v586, %v778
      %v780 = vpop.f32.mrf.mxu0
      %781 = vmatprep.mubr.f32.mxu0 0.0
      %782 = vmatmul.mubr.f32.gmra.mxu0 %v662
      %v783 = vpop.f32.mrf.mxu0
      %v784 = vadd.f32 %v591, %v783
      %v785 = vpop.f32.mrf.mxu0
      %786 = vmatprep.mubr.f32.mxu0 0.0
      %787 = vmatmul.mubr.f32.gmra.mxu0 %v665
      %v788 = vpop.f32.mrf.mxu0
      %v789 = vadd.f32 %v596, %v788
      %v790 = vpop.f32.mrf.mxu0
      %791 = vmatprep.mubr.f32.mxu0 0.0
      %792 = vmatmul.mubr.f32.gmra.mxu0 %v668
      %v793 = vpop.f32.mrf.mxu0
      %v794 = vadd.f32 %v601, %v793
      %v795 = vpop.f32.mrf.mxu0
      %796 = vmatprep.mubr.f32.mxu0 0.0
      %797 = vmatmul.mubr.f32.gmra.mxu0 %v671
      %v798 = vpop.f32.mrf.mxu0
      %v799 = vadd.f32 %v606, %v798
      %v800 = vpop.f32.mrf.mxu0
      %801 = vmatprep.mubr.f32.mxu0 0.0
      %802 = vmatmul.mubr.f32.gmra.mxu0 %v674
      %v803 = vpop.f32.mrf.mxu0
      %v804 = vadd.f32 %v611, %v803
      %v805 = vpop.f32.mrf.mxu0
      %806 = vmatprep.mubr.f32.mxu0 0.0
      %807 = vmatmul.mubr.f32.gmra.mxu0 %v677
      %v808 = vpop.f32.mrf.mxu0
      %v809 = vadd.f32 %v616, %v808
      %v810 = vpop.f32.mrf.mxu0
      %811 = vmatprep.mubr.f32.mxu0 0.0
      %812 = vmatmul.mubr.f32.gmra.mxu0 %v680
      %v813 = vpop.f32.mrf.mxu0
      %v814 = vadd.f32 %v621, %v813
      %v815 = vpop.f32.mrf.mxu0
      %816 = vmatprep.mubr.f32.mxu0 0.0
      %817 = vmatmul.mubr.f32.gmra.mxu0 %v683
      %v818 = vpop.f32.mrf.mxu0
      %v819 = vadd.f32 %v626, %v818
      %v820 = vpop.f32.mrf.mxu0
      %821 = vmatprep.mubr.f32.mxu0 0.0
      %822 = vmatmul.mubr.f32.gmra.mxu0 %v686
      %v823 = vpop.f32.mrf.mxu0
      %v824 = vadd.f32 %v631, %v823
      %v825 = vpop.f32.mrf.mxu0
      %826 = vmatprep.mubr.f32.mxu0 0.0
      %827 = vmatmul.mubr.f32.gmra.mxu0 %v689
      %v828 = vpop.f32.mrf.mxu0
      %v829 = vadd.f32 %v636, %v828
      %v830 = vpop.f32.mrf.mxu0
      %831 = vmatprep.mubr.f32.mxu0 0.0
      %832 = vmatmul.mubr.f32.gmra.mxu0 %v692
      %v833 = vpop.f32.mrf.mxu0
      %v834 = vadd.f32 %v641, %v833
      %v835 = vpop.f32.mrf.mxu0
      %836 = vmatprep.mubr.f32.mxu0 0.0
      %837 = vmatmul.mubr.f32.gmra.mxu0 %v695
      %v838 = vpop.f32.mrf.mxu0
      %v839 = vadd.f32 %v646, %v838
      %v840 = vpop.f32.mrf.mxu0
      %841 = vdwg.mxu0
      %v842 = vld [vmem:[%s6] sm:$0x1]
      %v844 = vlaneseq
      %v845 = vshrl.u32 %v844, 7
      %v846 = vsub.s32 0, %v845
      %v847 = vrot.slane %v842, %v846
      %v849 = vadd.f32 %v764, %v847
      %v850 = vadd.f32 %v769, %v847
      %v851 = vadd.f32 %v774, %v847
      %v852 = vadd.f32 %v779, %v847
      %v853 = vadd.f32 %v784, %v847
      %v854 = vadd.f32 %v789, %v847
      %v855 = vadd.f32 %v794, %v847
      %v856 = vadd.f32 %v799, %v847
      %v857 = vadd.f32 %v804, %v847
      %v858 = vadd.f32 %v809, %v847
      %v859 = vadd.f32 %v814, %v847
      %v860 = vadd.f32 %v819, %v847
      %v861 = vadd.f32 %v824, %v847
      %v862 = vadd.f32 %v829, %v847
      %v863 = vadd.f32 %v834, %v847
      %v864 = vadd.f32 %v839, %v847
      %v865 = vtanh.pop %v849
      %v866 = vtanh.pop %v850
      %v867 = vtanh.pop %v851
      %v868 = vtanh.pop %v852
      %v869 = vtanh.pop %v853
      %v870 = vtanh.pop %v854
      %v871 = vtanh.pop %v855
      %v872 = vtanh.pop %v856
      %v873 = vtanh.pop %v857
      %v874 = vtanh.pop %v858
      %v875 = vtanh.pop %v859
      %v876 = vtanh.pop %v860
      %v877 = vtanh.pop %v861
      %v878 = vtanh.pop %v862
      %v879 = vtanh.pop %v863
      %v880 = vtanh.pop %v864
      %v881 = vld [vmem:[%s398] sm:$0xff]
      %v882 = vld [vmem:[%s398 + $0x8] sm:$0xff]
      %v883 = vld [vmem:[%s398 + $0x10] sm:$0xff]
      %v884 = vld [vmem:[%s398 + $0x18] sm:$0xff]
      %v885 = vld [vmem:[%s398 + $0x20] sm:$0xff]
      %v886 = vld [vmem:[%s398 + $0x28] sm:$0xff]
      %v887 = vld [vmem:[%s398 + $0x30] sm:$0xff]
      %v888 = vld [vmem:[%s398 + $0x38] sm:$0xff]
      %v889 = vld [vmem:[%s398 + $0x40] sm:$0xff]
      %v890 = vld [vmem:[%s398 + $0x48] sm:$0xff]
      %v891 = vld [vmem:[%s398 + $0x50] sm:$0xff]
      %v892 = vld [vmem:[%s398 + $0x58] sm:$0xff]
      %v893 = vld [vmem:[%s398 + $0x60] sm:$0xff]
      %v894 = vld [vmem:[%s398 + $0x68] sm:$0xff]
      %v895 = vld [vmem:[%s398 + $0x70] sm:$0xff]
      %v896 = vld [vmem:[%s398 + $0x78] sm:$0xff]
      %898 = vset.pattern.permute.xlu0 0
      %899 = vperm.xlu0 %898, %v881
      %v900 = vpop.permute.xlu0 %899
      %903 = vset.pattern.permute.xlu0 0
      %904 = vperm.xlu0 %903, %v882
      %v905 = vpop.permute.xlu0 %904
      %908 = vset.pattern.permute.xlu0 0
      %909 = vperm.xlu0 %908, %v883
      %v910 = vpop.permute.xlu0 %909
      %913 = vset.pattern.permute.xlu0 0
      %914 = vperm.xlu0 %913, %v884
      %v915 = vpop.permute.xlu0 %914
      %918 = vset.pattern.permute.xlu0 0
      %919 = vperm.xlu0 %918, %v885
      %v920 = vpop.permute.xlu0 %919
      %923 = vset.pattern.permute.xlu0 0
      %924 = vperm.xlu0 %923, %v886
      %v925 = vpop.permute.xlu0 %924
      %928 = vset.pattern.permute.xlu0 0
      %929 = vperm.xlu0 %928, %v887
      %v930 = vpop.permute.xlu0 %929
      %933 = vset.pattern.permute.xlu0 0
      %934 = vperm.xlu0 %933, %v888
      %v935 = vpop.permute.xlu0 %934
      %938 = vset.pattern.permute.xlu0 0
      %939 = vperm.xlu0 %938, %v889
      %v940 = vpop.permute.xlu0 %939
      %943 = vset.pattern.permute.xlu0 0
      %944 = vperm.xlu0 %943, %v890
      %v945 = vpop.permute.xlu0 %944
      %948 = vset.pattern.permute.xlu0 0
      %949 = vperm.xlu0 %948, %v891
      %v950 = vpop.permute.xlu0 %949
      %953 = vset.pattern.permute.xlu0 0
      %954 = vperm.xlu0 %953, %v892
      %v955 = vpop.permute.xlu0 %954
      %958 = vset.pattern.permute.xlu0 0
      %959 = vperm.xlu0 %958, %v893
      %v960 = vpop.permute.xlu0 %959
      %963 = vset.pattern.permute.xlu0 0
      %964 = vperm.xlu0 %963, %v894
      %v965 = vpop.permute.xlu0 %964
      %968 = vset.pattern.permute.xlu0 0
      %969 = vperm.xlu0 %968, %v895
      %v970 = vpop.permute.xlu0 %969
      %973 = vset.pattern.permute.xlu0 0
      %974 = vperm.xlu0 %973, %v896
      %v975 = vpop.permute.xlu0 %974
      %v977 = vmul.f32 %v865, %v900
      %v978 = vmul.f32 %v866, %v905
      %v979 = vmul.f32 %v867, %v910
      %v980 = vmul.f32 %v868, %v915
      %v981 = vmul.f32 %v869, %v920
      %v982 = vmul.f32 %v870, %v925
      %v983 = vmul.f32 %v871, %v930
      %v984 = vmul.f32 %v872, %v935
      %v985 = vmul.f32 %v873, %v940
      %v986 = vmul.f32 %v874, %v945
      %v987 = vmul.f32 %v875, %v950
      %v988 = vmul.f32 %v876, %v955
      %v989 = vmul.f32 %v877, %v960
      %v990 = vmul.f32 %v878, %v965
      %v991 = vmul.f32 %v879, %v970
      %v992 = vmul.f32 %v880, %v975
      %994 = vset.pattern.permute.xlu0 0
      %995 = vperm.xlu0 %994, %v977
      %v996 = vpop.permute.xlu0 %995
      %999 = vset.pattern.permute.xlu0 0
      %1000 = vperm.xlu0 %999, %v978
      %v1001 = vpop.permute.xlu0 %1000
      %1004 = vset.pattern.permute.xlu0 0
      %1005 = vperm.xlu0 %1004, %v979
      %v1006 = vpop.permute.xlu0 %1005
      %1009 = vset.pattern.permute.xlu0 0
      %1010 = vperm.xlu0 %1009, %v980
      %v1011 = vpop.permute.xlu0 %1010
      %1014 = vset.pattern.permute.xlu0 0
      %1015 = vperm.xlu0 %1014, %v981
      %v1016 = vpop.permute.xlu0 %1015
      %1019 = vset.pattern.permute.xlu0 0
      %1020 = vperm.xlu0 %1019, %v982
      %v1021 = vpop.permute.xlu0 %1020
      %1024 = vset.pattern.permute.xlu0 0
      %1025 = vperm.xlu0 %1024, %v983
      %v1026 = vpop.permute.xlu0 %1025
      %1029 = vset.pattern.permute.xlu0 0
      %1030 = vperm.xlu0 %1029, %v984
      %v1031 = vpop.permute.xlu0 %1030
      %1034 = vset.pattern.permute.xlu0 0
      %1035 = vperm.xlu0 %1034, %v985
      %v1036 = vpop.permute.xlu0 %1035
      %1039 = vset.pattern.permute.xlu0 0
      %1040 = vperm.xlu0 %1039, %v986
      %v1041 = vpop.permute.xlu0 %1040
      %1044 = vset.pattern.permute.xlu0 0
      %1045 = vperm.xlu0 %1044, %v987
      %v1046 = vpop.permute.xlu0 %1045
      %1049 = vset.pattern.permute.xlu0 0
      %1050 = vperm.xlu0 %1049, %v988
      %v1051 = vpop.permute.xlu0 %1050
      %1054 = vset.pattern.permute.xlu0 0
      %1055 = vperm.xlu0 %1054, %v989
      %v1056 = vpop.permute.xlu0 %1055
      %1059 = vset.pattern.permute.xlu0 0
      %1060 = vperm.xlu0 %1059, %v990
      %v1061 = vpop.permute.xlu0 %1060
      %1064 = vset.pattern.permute.xlu0 0
      %1065 = vperm.xlu0 %1064, %v991
      %v1066 = vpop.permute.xlu0 %1065
      %1069 = vset.pattern.permute.xlu0 0
      %1070 = vperm.xlu0 %1069, %v992
      %v1071 = vpop.permute.xlu0 %1070
      %v1073 = vmul.f32 %v996, %v415
      %v1074 = vmul.f32 %v1001, %v416
      %v1075 = vmul.f32 %v1006, %v417
      %v1076 = vmul.f32 %v1011, %v418
      %v1077 = vmul.f32 %v1016, %v419
      %v1078 = vmul.f32 %v1021, %v420
      %v1079 = vmul.f32 %v1026, %v421
      %v1080 = vmul.f32 %v1031, %v422
      %v1081 = vmul.f32 %v1036, %v423
      %v1082 = vmul.f32 %v1041, %v424
      %v1083 = vmul.f32 %v1046, %v425
      %v1084 = vmul.f32 %v1051, %v426
      %v1085 = vmul.f32 %v1056, %v427
      %v1086 = vmul.f32 %v1061, %v428
      %v1087 = vmul.f32 %v1066, %v429
      %v1088 = vmul.f32 %v1071, %v430
      %1089 = vset.pattern.permute.xlu0 1
      %1090 = vperm.xlu0 %1089, %v977
      %v1091 = vpop.permute.xlu0 %1090
      %1093 = vset.pattern.permute.xlu0 1
      %1094 = vperm.xlu0 %1093, %v978
      %v1095 = vpop.permute.xlu0 %1094
      %1097 = vset.pattern.permute.xlu0 1
      %1098 = vperm.xlu0 %1097, %v979
      %v1099 = vpop.permute.xlu0 %1098
      %1101 = vset.pattern.permute.xlu0 1
      %1102 = vperm.xlu0 %1101, %v980
      %v1103 = vpop.permute.xlu0 %1102
      %1105 = vset.pattern.permute.xlu0 1
      %1106 = vperm.xlu0 %1105, %v981
      %v1107 = vpop.permute.xlu0 %1106
      %1109 = vset.pattern.permute.xlu0 1
      %1110 = vperm.xlu0 %1109, %v982
      %v1111 = vpop.permute.xlu0 %1110
      %1113 = vset.pattern.permute.xlu0 1
      %1114 = vperm.xlu0 %1113, %v983
      %v1115 = vpop.permute.xlu0 %1114
      %1117 = vset.pattern.permute.xlu0 1
      %1118 = vperm.xlu0 %1117, %v984
      %v1119 = vpop.permute.xlu0 %1118
      %1121 = vset.pattern.permute.xlu0 1
      %1122 = vperm.xlu0 %1121, %v985
      %v1123 = vpop.permute.xlu0 %1122
      %1125 = vset.pattern.permute.xlu0 1
      %1126 = vperm.xlu0 %1125, %v986
      %v1127 = vpop.permute.xlu0 %1126
      %1129 = vset.pattern.permute.xlu0 1
      %1130 = vperm.xlu0 %1129, %v987
      %v1131 = vpop.permute.xlu0 %1130
      %1133 = vset.pattern.permute.xlu0 1
      %1134 = vperm.xlu0 %1133, %v988
      %v1135 = vpop.permute.xlu0 %1134
      %1137 = vset.pattern.permute.xlu0 1
      %1138 = vperm.xlu0 %1137, %v989
      %v1139 = vpop.permute.xlu0 %1138
      %1141 = vset.pattern.permute.xlu0 1
      %1142 = vperm.xlu0 %1141, %v990
      %v1143 = vpop.permute.xlu0 %1142
      %1145 = vset.pattern.permute.xlu0 1
      %1146 = vperm.xlu0 %1145, %v991
      %v1147 = vpop.permute.xlu0 %1146
      %1149 = vset.pattern.permute.xlu0 1
      %1150 = vperm.xlu0 %1149, %v992
      %v1151 = vpop.permute.xlu0 %1150
      %v1153 = vmul.f32 %v1091, %v415
      %v1154 = vmul.f32 %v1095, %v416
      %v1155 = vmul.f32 %v1099, %v417
      %v1156 = vmul.f32 %v1103, %v418
      %v1157 = vmul.f32 %v1107, %v419
      %v1158 = vmul.f32 %v1111, %v420
      %v1159 = vmul.f32 %v1115, %v421
      %v1160 = vmul.f32 %v1119, %v422
      %v1161 = vmul.f32 %v1123, %v423
      %v1162 = vmul.f32 %v1127, %v424
      %v1163 = vmul.f32 %v1131, %v425
      %v1164 = vmul.f32 %v1135, %v426
      %v1165 = vmul.f32 %v1139, %v427
      %v1166 = vmul.f32 %v1143, %v428
      %v1167 = vmul.f32 %v1147, %v429
      %v1168 = vmul.f32 %v1151, %v430
      %1169 = vset.pattern.permute.xlu0 2
      %1170 = vperm.xlu0 %1169, %v977
      %v1171 = vpop.permute.xlu0 %1170
      %1173 = vset.pattern.permute.xlu0 2
      %1174 = vperm.xlu0 %1173, %v978
      %v1175 = vpop.permute.xlu0 %1174
      %1177 = vset.pattern.permute.xlu0 2
      %1178 = vperm.xlu0 %1177, %v979
      %v1179 = vpop.permute.xlu0 %1178
      %1181 = vset.pattern.permute.xlu0 2
      %1182 = vperm.xlu0 %1181, %v980
      %v1183 = vpop.permute.xlu0 %1182
      %1185 = vset.pattern.permute.xlu0 2
      %1186 = vperm.xlu0 %1185, %v981
      %v1187 = vpop.permute.xlu0 %1186
      %1189 = vset.pattern.permute.xlu0 2
      %1190 = vperm.xlu0 %1189, %v982
      %v1191 = vpop.permute.xlu0 %1190
      %1193 = vset.pattern.permute.xlu0 2
      %1194 = vperm.xlu0 %1193, %v983
      %v1195 = vpop.permute.xlu0 %1194
      %1197 = vset.pattern.permute.xlu0 2
      %1198 = vperm.xlu0 %1197, %v984
      %v1199 = vpop.permute.xlu0 %1198
      %1201 = vset.pattern.permute.xlu0 2
      %1202 = vperm.xlu0 %1201, %v985
      %v1203 = vpop.permute.xlu0 %1202
      %1205 = vset.pattern.permute.xlu0 2
      %1206 = vperm.xlu0 %1205, %v986
      %v1207 = vpop.permute.xlu0 %1206
      %1209 = vset.pattern.permute.xlu0 2
      %1210 = vperm.xlu0 %1209, %v987
      %v1211 = vpop.permute.xlu0 %1210
      %1213 = vset.pattern.permute.xlu0 2
      %1214 = vperm.xlu0 %1213, %v988
      %v1215 = vpop.permute.xlu0 %1214
      %1217 = vset.pattern.permute.xlu0 2
      %1218 = vperm.xlu0 %1217, %v989
      %v1219 = vpop.permute.xlu0 %1218
      %1221 = vset.pattern.permute.xlu0 2
      %1222 = vperm.xlu0 %1221, %v990
      %v1223 = vpop.permute.xlu0 %1222
      %1225 = vset.pattern.permute.xlu0 2
      %1226 = vperm.xlu0 %1225, %v991
      %v1227 = vpop.permute.xlu0 %1226
      %1229 = vset.pattern.permute.xlu0 2
      %1230 = vperm.xlu0 %1229, %v992
      %v1231 = vpop.permute.xlu0 %1230
      %v1233 = vmul.f32 %v1171, %v415
      %v1234 = vmul.f32 %v1175, %v416
      %v1235 = vmul.f32 %v1179, %v417
      %v1236 = vmul.f32 %v1183, %v418
      %v1237 = vmul.f32 %v1187, %v419
      %v1238 = vmul.f32 %v1191, %v420
      %v1239 = vmul.f32 %v1195, %v421
      %v1240 = vmul.f32 %v1199, %v422
      %v1241 = vmul.f32 %v1203, %v423
      %v1242 = vmul.f32 %v1207, %v424
      %v1243 = vmul.f32 %v1211, %v425
      %v1244 = vmul.f32 %v1215, %v426
      %v1245 = vmul.f32 %v1219, %v427
      %v1246 = vmul.f32 %v1223, %v428
      %v1247 = vmul.f32 %v1227, %v429
      %v1248 = vmul.f32 %v1231, %v430
      %1249 = vset.pattern.permute.xlu0 3
      %1250 = vperm.xlu0 %1249, %v977
      %v1251 = vpop.permute.xlu0 %1250
      %1253 = vset.pattern.permute.xlu0 3
      %1254 = vperm.xlu0 %1253, %v978
      %v1255 = vpop.permute.xlu0 %1254
      %1257 = vset.pattern.permute.xlu0 3
      %1258 = vperm.xlu0 %1257, %v979
      %v1259 = vpop.permute.xlu0 %1258
      %1261 = vset.pattern.permute.xlu0 3
      %1262 = vperm.xlu0 %1261, %v980
      %v1263 = vpop.permute.xlu0 %1262
      %1265 = vset.pattern.permute.xlu0 3
      %1266 = vperm.xlu0 %1265, %v981
      %v1267 = vpop.permute.xlu0 %1266
      %1269 = vset.pattern.permute.xlu0 3
      %1270 = vperm.xlu0 %1269, %v982
      %v1271 = vpop.permute.xlu0 %1270
      %1273 = vset.pattern.permute.xlu0 3
      %1274 = vperm.xlu0 %1273, %v983
      %v1275 = vpop.permute.xlu0 %1274
      %1277 = vset.pattern.permute.xlu0 3
      %1278 = vperm.xlu0 %1277, %v984
      %v1279 = vpop.permute.xlu0 %1278
      %1281 = vset.pattern.permute.xlu0 3
      %1282 = vperm.xlu0 %1281, %v985
      %v1283 = vpop.permute.xlu0 %1282
      %1285 = vset.pattern.permute.xlu0 3
      %1286 = vperm.xlu0 %1285, %v986
      %v1287 = vpop.permute.xlu0 %1286
      %1289 = vset.pattern.permute.xlu0 3
      %1290 = vperm.xlu0 %1289, %v987
      %v1291 = vpop.permute.xlu0 %1290
      %1293 = vset.pattern.permute.xlu0 3
      %1294 = vperm.xlu0 %1293, %v988
      %v1295 = vpop.permute.xlu0 %1294
      %1297 = vset.pattern.permute.xlu0 3
      %1298 = vperm.xlu0 %1297, %v989
      %v1299 = vpop.permute.xlu0 %1298
      %1301 = vset.pattern.permute.xlu0 3
      %1302 = vperm.xlu0 %1301, %v990
      %v1303 = vpop.permute.xlu0 %1302
      %1305 = vset.pattern.permute.xlu0 3
      %1306 = vperm.xlu0 %1305, %v991
      %v1307 = vpop.permute.xlu0 %1306
      %1309 = vset.pattern.permute.xlu0 3
      %1310 = vperm.xlu0 %1309, %v992
      %v1311 = vpop.permute.xlu0 %1310
      %v1313 = vmul.f32 %v1251, %v415
      %v1314 = vmul.f32 %v1255, %v416
      %v1315 = vmul.f32 %v1259, %v417
      %v1316 = vmul.f32 %v1263, %v418
      %v1317 = vmul.f32 %v1267, %v419
      %v1318 = vmul.f32 %v1271, %v420
      %v1319 = vmul.f32 %v1275, %v421
      %v1320 = vmul.f32 %v1279, %v422
      %v1321 = vmul.f32 %v1283, %v423
      %v1322 = vmul.f32 %v1287, %v424
      %v1323 = vmul.f32 %v1291, %v425
      %v1324 = vmul.f32 %v1295, %v426
      %v1325 = vmul.f32 %v1299, %v427
      %v1326 = vmul.f32 %v1303, %v428
      %v1327 = vmul.f32 %v1307, %v429
      %v1328 = vmul.f32 %v1311, %v430
      %1345 = vrot.lane.b32.xlu0 %v1153, 32
      %v1346 = vpop.permute.xlu0 %1345
      %1347 = vrot.lane.b32.xlu0 %v1154, 32
      %v1348 = vpop.permute.xlu0 %1347
      %1349 = vrot.lane.b32.xlu0 %v1155, 32
      %v1350 = vpop.permute.xlu0 %1349
      %1351 = vrot.lane.b32.xlu0 %v1156, 32
      %v1352 = vpop.permute.xlu0 %1351
      %1353 = vrot.lane.b32.xlu0 %v1157, 32
      %v1354 = vpop.permute.xlu0 %1353
      %1355 = vrot.lane.b32.xlu0 %v1158, 32
      %v1356 = vpop.permute.xlu0 %1355
      %1357 = vrot.lane.b32.xlu0 %v1159, 32
      %v1358 = vpop.permute.xlu0 %1357
      %1359 = vrot.lane.b32.xlu0 %v1160, 32
      %v1360 = vpop.permute.xlu0 %1359
      %1361 = vrot.lane.b32.xlu0 %v1161, 32
      %v1362 = vpop.permute.xlu0 %1361
      %1363 = vrot.lane.b32.xlu0 %v1162, 32
      %v1364 = vpop.permute.xlu0 %1363
      %1365 = vrot.lane.b32.xlu0 %v1163, 32
      %v1366 = vpop.permute.xlu0 %1365
      %1367 = vrot.lane.b32.xlu0 %v1164, 32
      %v1368 = vpop.permute.xlu0 %1367
      %1369 = vrot.lane.b32.xlu0 %v1165, 32
      %v1370 = vpop.permute.xlu0 %1369
      %1371 = vrot.lane.b32.xlu0 %v1166, 32
      %v1372 = vpop.permute.xlu0 %1371
      %1373 = vrot.lane.b32.xlu0 %v1167, 32
      %v1374 = vpop.permute.xlu0 %1373
      %1375 = vrot.lane.b32.xlu0 %v1168, 32
      %v1376 = vpop.permute.xlu0 %1375
      %1409 = vrot.lane.b32.xlu0 %v1233, 64
      %v1410 = vpop.permute.xlu0 %1409
      %1411 = vrot.lane.b32.xlu0 %v1234, 64
      %v1412 = vpop.permute.xlu0 %1411
      %1413 = vrot.lane.b32.xlu0 %v1235, 64
      %v1414 = vpop.permute.xlu0 %1413
      %1415 = vrot.lane.b32.xlu0 %v1236, 64
      %v1416 = vpop.permute.xlu0 %1415
      %1417 = vrot.lane.b32.xlu0 %v1237, 64
      %v1418 = vpop.permute.xlu0 %1417
      %1419 = vrot.lane.b32.xlu0 %v1238, 64
      %v1420 = vpop.permute.xlu0 %1419
      %1421 = vrot.lane.b32.xlu0 %v1239, 64
      %v1422 = vpop.permute.xlu0 %1421
      %1423 = vrot.lane.b32.xlu0 %v1240, 64
      %v1424 = vpop.permute.xlu0 %1423
      %1425 = vrot.lane.b32.xlu0 %v1241, 64
      %v1426 = vpop.permute.xlu0 %1425
      %1427 = vrot.lane.b32.xlu0 %v1242, 64
      %v1428 = vpop.permute.xlu0 %1427
      %1429 = vrot.lane.b32.xlu0 %v1243, 64
      %v1430 = vpop.permute.xlu0 %1429
      %1431 = vrot.lane.b32.xlu0 %v1244, 64
      %v1432 = vpop.permute.xlu0 %1431
      %1433 = vrot.lane.b32.xlu0 %v1245, 64
      %v1434 = vpop.permute.xlu0 %1433
      %1435 = vrot.lane.b32.xlu0 %v1246, 64
      %v1436 = vpop.permute.xlu0 %1435
      %1437 = vrot.lane.b32.xlu0 %v1247, 64
      %v1438 = vpop.permute.xlu0 %1437
      %1439 = vrot.lane.b32.xlu0 %v1248, 64
      %v1440 = vpop.permute.xlu0 %1439
      %1473 = vrot.lane.b32.xlu0 %v1313, 96
      %v1474 = vpop.permute.xlu0 %1473
      %1475 = vrot.lane.b32.xlu0 %v1314, 96
      %v1476 = vpop.permute.xlu0 %1475
      %1477 = vrot.lane.b32.xlu0 %v1315, 96
      %v1478 = vpop.permute.xlu0 %1477
      %1479 = vrot.lane.b32.xlu0 %v1316, 96
      %v1480 = vpop.permute.xlu0 %1479
      %1481 = vrot.lane.b32.xlu0 %v1317, 96
      %v1482 = vpop.permute.xlu0 %1481
      %1483 = vrot.lane.b32.xlu0 %v1318, 96
      %v1484 = vpop.permute.xlu0 %1483
      %1485 = vrot.lane.b32.xlu0 %v1319, 96
      %v1486 = vpop.permute.xlu0 %1485
      %1487 = vrot.lane.b32.xlu0 %v1320, 96
      %v1488 = vpop.permute.xlu0 %1487
      %1489 = vrot.lane.b32.xlu0 %v1321, 96
      %v1490 = vpop.permute.xlu0 %1489
      %1491 = vrot.lane.b32.xlu0 %v1322, 96
      %v1492 = vpop.permute.xlu0 %1491
      %1493 = vrot.lane.b32.xlu0 %v1323, 96
      %v1494 = vpop.permute.xlu0 %1493
      %1495 = vrot.lane.b32.xlu0 %v1324, 96
      %v1496 = vpop.permute.xlu0 %1495
      %1497 = vrot.lane.b32.xlu0 %v1325, 96
      %v1498 = vpop.permute.xlu0 %1497
      %1499 = vrot.lane.b32.xlu0 %v1326, 96
      %v1500 = vpop.permute.xlu0 %1499
      %1501 = vrot.lane.b32.xlu0 %v1327, 96
      %v1502 = vpop.permute.xlu0 %1501
      %1503 = vrot.lane.b32.xlu0 %v1328, 96
      %v1504 = vpop.permute.xlu0 %1503
      %v1521 = vsel %vm455, %v1073, %v1346
      %v1522 = vsel %vm455, %v1074, %v1348
      %v1523 = vsel %vm455, %v1075, %v1350
      %v1524 = vsel %vm455, %v1076, %v1352
      %v1525 = vsel %vm455, %v1077, %v1354
      %v1526 = vsel %vm455, %v1078, %v1356
      %v1527 = vsel %vm455, %v1079, %v1358
      %v1528 = vsel %vm455, %v1080, %v1360
      %v1529 = vsel %vm455, %v1081, %v1362
      %v1530 = vsel %vm455, %v1082, %v1364
      %v1531 = vsel %vm455, %v1083, %v1366
      %v1532 = vsel %vm455, %v1084, %v1368
      %v1533 = vsel %vm455, %v1085, %v1370
      %v1534 = vsel %vm455, %v1086, %v1372
      %v1535 = vsel %vm455, %v1087, %v1374
      %v1536 = vsel %vm455, %v1088, %v1376
      %vm1537 = vcmask 523264
      %v1538 = vsel %vm1537, %v1521, %v1410
      %v1539 = vsel %vm1537, %v1522, %v1412
      %v1540 = vsel %vm1537, %v1523, %v1414
      %v1541 = vsel %vm1537, %v1524, %v1416
      %v1542 = vsel %vm1537, %v1525, %v1418
      %v1543 = vsel %vm1537, %v1526, %v1420
      %v1544 = vsel %vm1537, %v1527, %v1422
      %v1545 = vsel %vm1537, %v1528, %v1424
      %v1546 = vsel %vm1537, %v1529, %v1426
      %v1547 = vsel %vm1537, %v1530, %v1428
      %v1548 = vsel %vm1537, %v1531, %v1430
      %v1549 = vsel %vm1537, %v1532, %v1432
      %v1550 = vsel %vm1537, %v1533, %v1434
      %v1551 = vsel %vm1537, %v1534, %v1436
      %v1552 = vsel %vm1537, %v1535, %v1438
      %v1553 = vsel %vm1537, %v1536, %v1440
      %vm1554 = vcmask 785408
      %v1555 = vsel %vm1554, %v1538, %v1474
      %v1556 = vsel %vm1554, %v1539, %v1476
      %v1557 = vsel %vm1554, %v1540, %v1478
      %v1558 = vsel %vm1554, %v1541, %v1480
      %v1559 = vsel %vm1554, %v1542, %v1482
      %v1560 = vsel %vm1554, %v1543, %v1484
      %v1561 = vsel %vm1554, %v1544, %v1486
      %v1562 = vsel %vm1554, %v1545, %v1488
      %v1563 = vsel %vm1554, %v1546, %v1490
      %v1564 = vsel %vm1554, %v1547, %v1492
      %v1565 = vsel %vm1554, %v1548, %v1494
      %v1566 = vsel %vm1554, %v1549, %v1496
      %v1567 = vsel %vm1554, %v1550, %v1498
      %v1568 = vsel %vm1554, %v1551, %v1500
      %v1569 = vsel %vm1554, %v1552, %v1502
      %v1570 = vsel %vm1554, %v1553, %v1504
      %v1571 = vpack.c.bf16 %v1556, %v1555
      %v1572 = vpack.c.bf16 %v1558, %v1557
      %v1573 = vpack.c.bf16 %v1560, %v1559
      %v1574 = vpack.c.bf16 %v1562, %v1561
      %v1575 = vpack.c.bf16 %v1564, %v1563
      %v1576 = vpack.c.bf16 %v1566, %v1565
      %v1577 = vpack.c.bf16 %v1568, %v1567
      %v1578 = vpack.c.bf16 %v1570, %v1569
      %s1579 = smul.u32 %s24, 32
      %v1580 = vlaneseq
      %v1581 = vshrl.u32 %v1580, 7
      %v1582 = vadd.s32 %v1581, 8
      %v1583 = vadd.s32 %v1581, 16
      %v1584 = vadd.s32 %v1581, 24
      %v1585 = vstv %s1579
      %v1586 = vadd.s32 %v1585, %v1581
      %v1587 = vadd.s32 %v1585, %v1582
      %v1588 = vadd.s32 %v1585, %v1583
      %v1589 = vadd.s32 %v1585, %v1584
      %v1590 = vld [vmem:[%s381] sm:$0x1]
      %v1591 = vlaneseq
      %v1592 = vshrl.u32 %v1591, 7
      %v1593 = vsub.s32 0, %v1592
      %v1594 = vrot.slane %v1590, %v1593
      %vm1595 = vcmp.eq.s32.totalorder %v1586, %v1594
      %vm1596 = vcmp.eq.s32.totalorder %v1587, %v1594
      %vm1597 = vcmp.eq.s32.totalorder %v1588, %v1594
      %vm1598 = vcmp.eq.s32.totalorder %v1589, %v1594
      %v1599 = vsel %vm1595, 1.0, 0.0
      %v1600 = vsel %vm1596, 1.0, 0.0
      %v1601 = vsel %vm1597, 1.0, 0.0
      %v1602 = vsel %vm1598, 1.0, 0.0
      %v1603 = vpack.c.bf16 %v1600, %v1599
      %v1604 = vpack.c.bf16 %v1602, %v1601
      %v1605 = vld [vmem:[#allocation2] sm:$0xff]
      %v1606 = vld [vmem:[#allocation2 + $0x8] sm:$0xff]
      %v1607 = vld [vmem:[#allocation2 + $0x10] sm:$0xff]
      %v1608 = vld [vmem:[#allocation2 + $0x18] sm:$0xff]
      %1609 = vmatprep.subr.bf16.mxu0 0
      %1610 = vmatpush1.bf16.msra.mxu0 %v1578
      %1611 = vmatprep.subr.bf16.mxu0 0
      %1612 = vmatpush1.bf16.msra.mxu0 %v1577
      %1613 = vmatprep.subr.bf16.mxu0 0
      %1614 = vmatpush1.bf16.msra.mxu0 %v1576
      %1615 = vmatprep.subr.bf16.mxu0 0
      %1616 = vmatpush1.bf16.msra.mxu0 %v1575
      %1617 = vmatprep.subr.bf16.mxu0 0
      %1618 = vmatpush1.bf16.msra.mxu0 %v1574
      %1619 = vmatprep.subr.bf16.mxu0 0
      %1620 = vmatpush1.bf16.msra.mxu0 %v1573
      %1621 = vmatprep.subr.bf16.mxu0 0
      %1622 = vmatpush1.bf16.msra.mxu0 %v1572
      %1623 = vmatprep.subr.bf16.mxu0 0
      %1624 = vmatpush1.bf16.msra.mxu0 %v1571
      %1625 = vmatprep.subr.bf16.mxu0 0
      %1626 = vmatpush2.bf16.msra.mxu0 0
      %1627 = vmatprep.subr.bf16.mxu0 0
      %1628 = vmatpush2.bf16.msra.mxu0 0
      %1629 = vmatprep.subr.bf16.mxu0 0
      %1630 = vmatpush2.bf16.msra.mxu0 0
      %1631 = vmatprep.subr.bf16.mxu0 0
      %1632 = vmatpush2.bf16.msra.mxu0 0
      %1633 = vmatprep.subr.bf16.mxu0 0
      %1634 = vmatpush2.bf16.msra.mxu0 0
      %1635 = vmatprep.subr.bf16.mxu0 0
      %1636 = vmatpush2.bf16.msra.mxu0 0
      %1637 = vmatprep.subr.bf16.mxu0 0
      %1638 = vmatpush2.bf16.msra.mxu0 0
      %1639 = vmatprep.subr.bf16.mxu0 0
      %1640 = vmatpush2.bf16.msra.mxu0 0
      %1641 = vmatprep.mubr.bf16.mxu0 0
      %1642 = vmatmul.mubr.bf16.gmra.mxu0 %v1603
      %v1643 = vpop.f32.mrf.mxu0
      %v1644 = vadd.f32 0.0, %v1643
      %v1645 = vpop.f32.mrf.mxu0
      %v1646 = vpop.f32.mrf.mxu0
      %v1647 = vadd.f32 0.0, %v1646
      %v1648 = vpop.f32.mrf.mxu0
      %1649 = vmatprep.mubr.bf16.mxu0 0
      %1650 = vmatmul.mubr.bf16.gmra.mxu0 %v1604
      %v1651 = vpop.f32.mrf.mxu0
      %v1652 = vadd.f32 0.0, %v1651
      %v1653 = vpop.f32.mrf.mxu0
      %v1654 = vpop.f32.mrf.mxu0
      %v1655 = vadd.f32 0.0, %v1654
      %v1656 = vpop.f32.mrf.mxu0
      %1657 = vdwg.mxu0
      %v1658 = vadd.f32 %v1605, %v1644
      %v1659 = vadd.f32 %v1606, %v1647
      %v1660 = vadd.f32 %v1607, %v1652
      %v1661 = vadd.f32 %v1608, %v1655
      %1662 = vst [vmem:[#allocation2] sm:$0xff] %v1658
      %1663 = vst [vmem:[#allocation2 + $0x8] sm:$0xff] %v1659
      %1664 = vst [vmem:[#allocation2 + $0x10] sm:$0xff] %v1660
      %1665 = vst [vmem:[#allocation2 + $0x18] sm:$0xff] %v1661
      %p1666 = scmp.eq.s32.totalorder %s25, 1
      // Predicated region
      $region61: #{tpu_custom_call.1} parent=55 // pred_check
        %p1667 = pneg %p1666
      $region62: #{tpu_custom_call.1} parent=55 // pred_check_branch
        %1669 = sbr.rel (%p1667) target = $region64
      $region63: #{tpu_custom_call.1} parent=55 // pred_region
        %v1670 = vld [vmem:[#allocation2] sm:$0xff]
        %v1671 = vld [vmem:[#allocation2 + $0x8] sm:$0xff]
        %v1672 = vld [vmem:[#allocation2 + $0x10] sm:$0xff]
        %v1673 = vld [vmem:[#allocation2 + $0x18] sm:$0xff]
        %v1674 = vld [vmem:[%s7] sm:$0xff]
        %v1675 = vld [vmem:[%s7 + $0x8] sm:$0xff]
        %v1676 = vld [vmem:[%s7 + $0x10] sm:$0xff]
        %v1677 = vld [vmem:[%s7 + $0x18] sm:$0xff]
        %v1678 = vld [vmem:[%s7 + $0x20] sm:$0xff]
        %v1679 = vld [vmem:[%s7 + $0x28] sm:$0xff]
        %v1680 = vld [vmem:[%s7 + $0x30] sm:$0xff]
        %v1681 = vld [vmem:[%s7 + $0x38] sm:$0xff]
        %v1682 = vld [vmem:[%s7 + $0x40] sm:$0xff]
        %v1683 = vld [vmem:[%s7 + $0x48] sm:$0xff]
        %v1684 = vld [vmem:[%s7 + $0x50] sm:$0xff]
        %v1685 = vld [vmem:[%s7 + $0x58] sm:$0xff]
        %v1686 = vld [vmem:[%s7 + $0x60] sm:$0xff]
        %v1687 = vld [vmem:[%s7 + $0x68] sm:$0xff]
        %v1688 = vld [vmem:[%s7 + $0x70] sm:$0xff]
        %v1689 = vld [vmem:[%s7 + $0x78] sm:$0xff]
        %v1690 = vld [vmem:[%s8] sm:$0x1]
        %v1692 = vlaneseq
        %v1693 = vshrl.u32 %v1692, 7
        %v1694 = vsub.s32 0, %v1693
        %v1695 = vrot.slane %v1690, %v1694
        %1697 = vmatprep.subr.mxu0 0.0
        %1698 = vmatpush1.msra.mxu0 %v1689
        %1699 = vmatprep.subr.mxu0 0.0
        %1700 = vmatpush1.msra.mxu0 %v1688
        %1701 = vmatprep.subr.mxu0 0.0
        %1702 = vmatpush1.msra.mxu0 %v1687
        %1703 = vmatprep.subr.mxu0 0.0
        %1704 = vmatpush1.msra.mxu0 %v1686
        %1705 = vmatprep.subr.mxu0 0.0
        %1706 = vmatpush1.msra.mxu0 %v1685
        %1707 = vmatprep.subr.mxu0 0.0
        %1708 = vmatpush1.msra.mxu0 %v1684
        %1709 = vmatprep.subr.mxu0 0.0
        %1710 = vmatpush1.msra.mxu0 %v1683
        %1711 = vmatprep.subr.mxu0 0.0
        %1712 = vmatpush1.msra.mxu0 %v1682
        %1713 = vmatprep.subr.mxu0 0.0
        %1714 = vmatpush1.msra.mxu0 %v1681
        %1715 = vmatprep.subr.mxu0 0.0
        %1716 = vmatpush1.msra.mxu0 %v1680
        %1717 = vmatprep.subr.mxu0 0.0
        %1718 = vmatpush1.msra.mxu0 %v1679
        %1719 = vmatprep.subr.mxu0 0.0
        %1720 = vmatpush1.msra.mxu0 %v1678
        %1721 = vmatprep.subr.mxu0 0.0
        %1722 = vmatpush1.msra.mxu0 %v1677
        %1723 = vmatprep.subr.mxu0 0.0
        %1724 = vmatpush1.msra.mxu0 %v1676
        %1725 = vmatprep.subr.mxu0 0.0
        %1726 = vmatpush1.msra.mxu0 %v1675
        %1727 = vmatprep.subr.mxu0 0.0
        %1728 = vmatpush1.msra.mxu0 %v1674
        %1729 = vmatprep.subr.mxu0 0.0
        %1730 = vmatpush2.msra.mxu0 0.0
        %1731 = vmatprep.subr.mxu0 0.0
        %1732 = vmatpush2.msra.mxu0 0.0
        %1733 = vmatprep.subr.mxu0 0.0
        %1734 = vmatpush2.msra.mxu0 0.0
        %1735 = vmatprep.subr.mxu0 0.0
        %1736 = vmatpush2.msra.mxu0 0.0
        %1737 = vmatprep.subr.mxu0 0.0
        %1738 = vmatpush2.msra.mxu0 0.0
        %1739 = vmatprep.subr.mxu0 0.0
        %1740 = vmatpush2.msra.mxu0 0.0
        %1741 = vmatprep.subr.mxu0 0.0
        %1742 = vmatpush2.msra.mxu0 0.0
        %1743 = vmatprep.subr.mxu0 0.0
        %1744 = vmatpush2.msra.mxu0 0.0
        %1745 = vmatprep.subr.mxu0 0.0
        %1746 = vmatpush2.msra.mxu0 0.0
        %1747 = vmatprep.subr.mxu0 0.0
        %1748 = vmatpush2.msra.mxu0 0.0
        %1749 = vmatprep.subr.mxu0 0.0
        %1750 = vmatpush2.msra.mxu0 0.0
        %1751 = vmatprep.subr.mxu0 0.0
        %1752 = vmatpush2.msra.mxu0 0.0
        %1753 = vmatprep.subr.mxu0 0.0
        %1754 = vmatpush2.msra.mxu0 0.0
        %1755 = vmatprep.subr.mxu0 0.0
        %1756 = vmatpush2.msra.mxu0 0.0
        %1757 = vmatprep.subr.mxu0 0.0
        %1758 = vmatpush2.msra.mxu0 0.0
        %1759 = vmatprep.subr.mxu0 0.0
        %1760 = vmatpush2.msra.mxu0 0.0
        %1761 = vmatprep.mubr.f32.mxu0 0.0
        %1762 = vmatmul.mubr.f32.gmra.mxu0 %v1670
        %v1763 = vpop.f32.mrf.mxu0
        %v1764 = vadd.f32 %v1695, %v1763
        %v1765 = vpop.f32.mrf.mxu0
        %1766 = vmatprep.mubr.f32.mxu0 0.0
        %1767 = vmatmul.mubr.f32.gmra.mxu0 %v1671
        %v1768 = vpop.f32.mrf.mxu0
        %v1769 = vadd.f32 %v1695, %v1768
        %v1770 = vpop.f32.mrf.mxu0
        %1771 = vmatprep.mubr.f32.mxu0 0.0
        %1772 = vmatmul.mubr.f32.gmra.mxu0 %v1672
        %v1773 = vpop.f32.mrf.mxu0
        %v1774 = vadd.f32 %v1695, %v1773
        %v1775 = vpop.f32.mrf.mxu0
        %1776 = vmatprep.mubr.f32.mxu0 0.0
        %1777 = vmatmul.mubr.f32.gmra.mxu0 %v1673
        %v1778 = vpop.f32.mrf.mxu0
        %v1779 = vadd.f32 %v1695, %v1778
        %v1780 = vpop.f32.mrf.mxu0
        %1781 = vdwg.mxu0
        %v1782 = vmax.f32 %v1764, 0.0
        %v1783 = vmax.f32 %v1769, 0.0
        %v1784 = vmax.f32 %v1774, 0.0
        %v1785 = vmax.f32 %v1779, 0.0
        %1786 = vst.msk [vmem:[%s404] sm:$0xff] %vm455, %v1782
        %1787 = vst.msk [vmem:[%s404 + $0x8] sm:$0xff] %vm455, %v1783
        %1788 = vst.msk [vmem:[%s404 + $0x10] sm:$0xff] %vm455, %v1784
        %1789 = vst.msk [vmem:[%s404 + $0x18] sm:$0xff] %vm455, %v1785
      $region64: #{tpu_custom_call.1} parent=55 // pred_fallthru
        _
      %s1790 = smul.u32 4, %s24
      %p1791 = scmp.lt.s32.totalorder %s1790, 7
      %s1792 = scalar_select %p1791, %s1790, 7
      %s1793 = smul.addr %s1792, 8
      %s1794 = scalar_lea.vmem %s9, %s1793
      // Predicated region
      $region65: #{tpu_custom_call.1} parent=55 // pred_check
        %p1795 = pneg %p259
      $region66: #{tpu_custom_call.1} parent=55 // pred_check_branch
        %1797 = sbr.rel (%p1795) target = $region68
      $region67: #{tpu_custom_call.1} parent=55 // pred_region
        %s1798 = smul.u32 4, %s24
      $region68: #{tpu_custom_call.1} parent=55 // pred_fallthru
        _
    $region56: #{tpu_custom_call.1} parent=5 // pred_fallthru
      _
    %p1799 = scmp.le.s32.totalorder 2, %s15
    // Predicated region
    $region69: #{tpu_custom_call.1} parent=5 // pred_check
      %p1800 = pneg %p1799
    $region70: #{tpu_custom_call.1} parent=5 // pred_check_branch
      %1802 = sbr.rel (%p1800) target = $region72
    $region71: #{tpu_custom_call.1} parent=5 // pred_region
      %s1803 = ssub.s32 %s15, 2
      // Predicated region
      $region73: #{tpu_custom_call.1} parent=71 // pred_check
        %p1804 = pneg %p265
      $region74: #{tpu_custom_call.1} parent=71 // pred_check_branch
        %1806 = sbr.rel (%p1804) target = $region76
      $region75: #{tpu_custom_call.1} parent=71 // pred_region
        %s1807 = smul.u32 4, %s26
        %p1808 = scmp.lt.s32.totalorder %s1807, 7
        %s1809 = scalar_select %p1808, %s1807, 7
        %s1810 = smul.addr %s1809, 8
        %s1811 = scalar_lea.vmem %s9, %s1810
      $region76: #{tpu_custom_call.1} parent=71 // pred_fallthru
        _
    $region72: #{tpu_custom_call.1} parent=5 // pred_fallthru
      _
  $region6: #{tpu_custom_call.1} parent=0 // loop_footer
    %s19 = sadd.s32 1, %s15
  $region7: #{tpu_custom_call.1} parent=0 // loop_footer_branch
    %14 = sbr.rel target = $region3
  $region8: #{tpu_custom_call.1} parent=0 // loop_exit
    _

</llo_original>
